<compile_context>
chip_gen: v7x
topology: tpu7x:2x2x1
jax: 0.10.0
libtpu: 0.0.40
codegen_flags: <defaults>
</compile_context>

<pallas_src>
import functools
import math

import jax
import jax.numpy as jnp
from jax import lax
from jax.experimental import pallas as pl
from jax.experimental.pallas import tpu as pltpu

COMPUTE_DTYPE = jnp.bfloat16   # weights + activation stream (MXU-friendly, halves HBM traffic)
ACC_DTYPE = jnp.float32        # accumulation / RMSNorm / softmax math


# --------------------------- chip-aware budgets -----------------------------

def _tpu_budget():
    """(vmem_limit_bytes, max_bm): bigger M tiles + raised scoped-VMEM limit on 128-MiB parts
    (v5e/v6e); conservative on v7x (64 MiB physical VMEM)."""
    phys = 64 << 20
    try:
        info = pltpu.get_tpu_info()
        phys = int(getattr(info, "vmem_capacity_bytes", phys))
    except Exception:
        pass
    if phys >= (96 << 20):
        return 64 << 20, 1024     # v5e / v6e (128 MiB physical)
    return 40 << 20, 512          # v7x (64 MiB physical)


VMEM_LIMIT, MAX_BM = _tpu_budget()


def _cparams(semantics):
    return pltpu.CompilerParams(dimension_semantics=semantics,
                                vmem_limit_bytes=VMEM_LIMIT)


def _choose_block_m(m, max_bm=None, align=16):
    """Largest `align`-aligned tile dividing m (<= max_bm); prefer >=2 grid steps so the
    pipeline has DMA/compute overlap and v7x's 2 TensorCores both get work."""
    if max_bm is None:
        max_bm = MAX_BM
    divisors = [bm for bm in range(align, min(m, max_bm) + 1, align) if m % bm == 0]
    if not divisors:
        return m
    best = divisors[-1]
    if m // best < 2:
        for bm in reversed(divisors[:-1]):
            if m // bm >= 2:
                return bm
    return best


# ----------------------------- Pallas kernel bodies ------------------------------

def _rmsnorm_f32(x, ln):
    # T5LayerNorm: x / sqrt(mean(x^2) + eps) * weight   (no mean subtraction, no bias)
    var = jnp.mean(x * x, axis=-1, keepdims=True)
    return x * lax.rsqrt(var + 1e-6) * ln


def _norm_qkv_kernel(x_ref, ln_ref, wqkv_ref, qkv_ref):
    # fused: RMSNorm (f32) + packed Q/K/V projection (single bf16 MXU matmul vs [D, 3*H*dk]).
    x = x_ref[...].astype(ACC_DTYPE)
    normed = _rmsnorm_f32(x, ln_ref[...]).astype(wqkv_ref.dtype)
    qkv = jnp.dot(normed, wqkv_ref[...], preferred_element_type=ACC_DTYPE)
    qkv_ref[...] = qkv.astype(qkv_ref.dtype)


def _attention_outproj_res_kernel(qkv_ref, bias_ref, mask_ref, wo_ref, res_ref, o_ref, ctx_ref,
                                  *, num_heads, d_kv):
    # One batch element, all heads statically unrolled.
    # T5 attention does NOT scale scores by 1/sqrt(d_kv); bias/mask are additive pre-softmax.
    # Matmul operands stay bf16 (f32 accumulation via preferred_element_type); softmax math f32.
    addm = mask_ref[0, 0]                                # [1, S] additive padding mask (f32)
    hd = num_heads * d_kv
    for h in range(num_heads):                           # static unroll over heads
        q = qkv_ref[0, :, h * d_kv:(h + 1) * d_kv]                       # bf16 [S, dk]
        k = qkv_ref[0, :, hd + h * d_kv:hd + (h + 1) * d_kv]             # bf16 [S, dk]
        v = qkv_ref[0, :, 2 * hd + h * d_kv:2 * hd + (h + 1) * d_kv]     # bf16 [S, dk]
        # QK^T without an explicit transpose: contract dim 1 of q against dim 1 of k.
        s = lax.dot_general(q, k, dimension_numbers=(((1,), (1,)), ((), ())),
                            preferred_element_type=ACC_DTYPE)            # f32 [S, S]
        s = s + bias_ref[0, h].astype(ACC_DTYPE) + addm
        m = jnp.max(s, axis=-1, keepdims=True)
        p = jnp.exp(s - m)
        inv = pl.reciprocal(jnp.sum(p, axis=-1, keepdims=True), approx=True)
        p = (p * inv).astype(v.dtype)                                     # bf16 for PV matmul
        # per-head write into scratch slice (no end-of-kernel concatenate, short live ranges)
        ctx_ref[:, h * d_kv:(h + 1) * d_kv] = jnp.dot(
            p, v, preferred_element_type=ACC_DTYPE).astype(ctx_ref.dtype)
    # fused output projection (single [S, H*dk] x [H*dk, D] bf16 matmul) + residual add
    out = jnp.dot(ctx_ref[...], wo_ref[...], preferred_element_type=ACC_DTYPE)
    o_ref[0] = (res_ref[0].astype(ACC_DTYPE) + out).astype(o_ref.dtype)


def _norm_ffn_residual_kernel(x_ref, ln_ref, wi_ref, wo_ref, o_ref):
    # fused: RMSNorm + T5DenseReluDense (no biases) + residual add; bf16 matmuls, f32 acc.
    x = x_ref[...].astype(ACC_DTYPE)
    normed = _rmsnorm_f32(x, ln_ref[...]).astype(wi_ref.dtype)
    h = jnp.dot(normed, wi_ref[...], preferred_element_type=ACC_DTYPE)
    h = jnp.maximum(h, 0.0).astype(wo_ref.dtype)
    out = jnp.dot(h, wo_ref[...], preferred_element_type=ACC_DTYPE)
    o_ref[...] = (x + out).astype(o_ref.dtype)


def _final_pool_cls_kernel(h_ref, ln_ref, w_ref, b_ref, o_ref):
    # fused, batched over ALL B rows in one shot: final RMSNorm + mean over seq (dim=1, unmasked,
    # matches torch .mean(dim=1)) + classifier Linear.  Single [B, D] x [D, 64] matmul.
    h = h_ref[...].astype(ACC_DTYPE)                                   # [B, S, D]
    normed = _rmsnorm_f32(h, ln_ref[...])
    pooled = jnp.mean(normed, axis=1)                                  # [B, D]
    logits = jnp.dot(pooled.astype(w_ref.dtype), w_ref[...],
                     preferred_element_type=ACC_DTYPE) + b_ref[...]
    o_ref[...] = logits.astype(o_ref.dtype)


# ----------------------------- kernel wrappers ------------------------------

def pallas_norm_qkv(x2d, ln, wqkv):
    m, d = x2d.shape
    n = wqkv.shape[1]
    bm = _choose_block_m(m)
    cost = pl.CostEstimate(
        flops=2 * m * d * n,
        transcendentals=m,
        bytes_accessed=x2d.size * x2d.dtype.itemsize
        + wqkv.size * wqkv.dtype.itemsize + m * n * x2d.dtype.itemsize)
    return pl.pallas_call(
        _norm_qkv_kernel,
        out_shape=jax.ShapeDtypeStruct((m, n), x2d.dtype),
        grid=(m // bm,),
        in_specs=[pl.BlockSpec((bm, d), lambda i: (i, 0)),
                  pl.BlockSpec((1, d), lambda i: (0, 0)),      # ln weight, resident
                  pl.BlockSpec((d, n), lambda i: (0, 0))],     # packed QKV weight, resident
        out_specs=pl.BlockSpec((bm, n), lambda i: (i, 0)),
        compiler_params=_cparams(("parallel",)),
        cost_estimate=cost,
    )(x2d, ln.reshape(1, d), wqkv)


def pallas_attention_outproj_residual(qkv, pos_bias, add_mask, wo, res3d, num_heads, d_kv):
    b, s, three_hd = qkv.shape
    hd = num_heads * d_kv
    d = wo.shape[1]
    kernel = functools.partial(_attention_outproj_res_kernel, num_heads=num_heads, d_kv=d_kv)
    cost = pl.CostEstimate(
        flops=b * (4 * num_heads * s * s * d_kv + 2 * s * hd * d),
        transcendentals=b * num_heads * s * s,
        bytes_accessed=(qkv.size * qkv.dtype.itemsize
                        + pos_bias.size * pos_bias.dtype.itemsize
                        + add_mask.size * add_mask.dtype.itemsize
                        + wo.size * wo.dtype.itemsize
                        + 2 * res3d.size * res3d.dtype.itemsize))
    return pl.pallas_call(
        kernel,
        out_shape=jax.ShapeDtypeStruct((b, s, d), res3d.dtype),
        grid=(b,),
        in_specs=[pl.BlockSpec((1, s, three_hd), lambda i: (i, 0, 0)),
                  # bias is shared across batch & layers: bf16 [1, H, S, S], constant index_map
                  pl.BlockSpec((1, num_heads, s, s), lambda i: (0, 0, 0, 0)),
                  pl.BlockSpec((1, 1, 1, s), lambda i: (i, 0, 0, 0)),
                  pl.BlockSpec((hd, d), lambda i: (0, 0)),          # wo, resident
                  pl.BlockSpec((1, s, d), lambda i: (i, 0, 0))],    # residual
        out_specs=pl.BlockSpec((1, s, d), lambda i: (i, 0, 0)),
        scratch_shapes=[pltpu.VMEM((s, hd), COMPUTE_DTYPE)],        # per-head ctx accumulator
        input_output_aliases={4: 0},                                # residual buffer reused in place
        compiler_params=_cparams(("parallel",)),
        cost_estimate=cost,
    )(qkv, pos_bias, add_mask, wo, res3d)


def pallas_norm_ffn_residual(x2d, ln, wi, wo):
    m, d = x2d.shape
    f = wi.shape[1]
    bm = _choose_block_m(m)
    cost = pl.CostEstimate(
        flops=4 * m * d * f,
        transcendentals=m,
        bytes_accessed=2 * x2d.size * x2d.dtype.itemsize
        + (wi.size + wo.size) * wi.dtype.itemsize)
    return pl.pallas_call(
        _norm_ffn_residual_kernel,
        out_shape=jax.ShapeDtypeStruct((m, d), x2d.dtype),
        grid=(m // bm,),
        in_specs=[pl.BlockSpec((bm, d), lambda i: (i, 0)),
                  pl.BlockSpec((1, d), lambda i: (0, 0)),
                  pl.BlockSpec((d, f), lambda i: (0, 0)),
                  pl.BlockSpec((f, d), lambda i: (0, 0))],
        out_specs=pl.BlockSpec((bm, d), lambda i: (i, 0)),
        input_output_aliases={0: 0},                                # residual buffer reused in place
        compiler_params=_cparams(("parallel",)),
        cost_estimate=cost,
    )(x2d, ln.reshape(1, d), wi, wo)


def pallas_final_pool_classify(h, ln, w, b):
    bsz, s, d = h.shape
    n = w.shape[1]
    return pl.pallas_call(
        _final_pool_cls_kernel,
        out_shape=jax.ShapeDtypeStruct((bsz, n), jnp.float32),
        grid=(1,),
        in_specs=[pl.BlockSpec((bsz, s, d), lambda i: (0, 0, 0)),
                  pl.BlockSpec((1, d), lambda i: (0, 0)),
                  pl.BlockSpec((d, n), lambda i: (0, 0)),
                  pl.BlockSpec((1, n), lambda i: (0, 0))],
        out_specs=pl.BlockSpec((bsz, n), lambda i: (0, 0)),
        compiler_params=_cparams(("arbitrary",)),
    )(h, ln.reshape(1, d), w, b.reshape(1, n))


# ----------------------------- T5 encoder glue ------------------------------

def relative_position_bucket(rel_pos, num_buckets=32, max_distance=128):
    # HF bidirectional bucketization (encoder).
    num_buckets = num_buckets // 2
    ret = (rel_pos > 0).astype(jnp.int32) * num_buckets
    n = jnp.abs(rel_pos)
    max_exact = num_buckets // 2
    is_small = n < max_exact
    val_if_large = max_exact + (
        jnp.log(n.astype(jnp.float32) / max_exact + 1e-20)
        / math.log(max_distance / max_exact)
        * (num_buckets - max_exact)
    ).astype(jnp.int32)
    val_if_large = jnp.minimum(val_if_large, num_buckets - 1)
    return ret + jnp.where(is_small, n, val_if_large)


def compute_position_bias(rel_bias_table, seq_len):
    # rel_bias_table: [num_buckets, H] -> bf16 [1, H, S, S]  (NOT broadcast over batch)
    ctx = jnp.arange(seq_len)[:, None]
    mem = jnp.arange(seq_len)[None, :]
    buckets = relative_position_bucket(mem - ctx)                 # [S, S]
    bias = jnp.take(rel_bias_table, buckets, axis=0)              # [S, S, H]
    return jnp.transpose(bias, (2, 0, 1))[None].astype(COMPUTE_DTYPE)


def t5_encoder_classifier(params, input_ids, attention_mask, cfg):
    bsz, s = input_ids.shape
    d, nh, dk = cfg["d_model"], cfg["num_heads"], cfg["d_kv"]
    hd = nh * dk

    # embedding lookup (glue)
    x2d = jnp.take(params["embed"], input_ids, axis=0).reshape(bsz * s, d)   # [M, D] bf16

    # shared relative-position bias bf16 [1, H, S, S] + additive padding mask f32 [B, 1, 1, S]
    pos_bias = compute_position_bias(params["rel_bias"], s)
    add_mask = ((1.0 - attention_mask.astype(jnp.float32))
                * jnp.finfo(jnp.float32).min)[:, None, None, :]

    for layer in params["layers"]:
        qkv = pallas_norm_qkv(x2d, layer["ln1"], layer["wqkv"])              # [M, 3*H*dk]
        x2d = pallas_attention_outproj_residual(
            qkv.reshape(bsz, s, 3 * hd), pos_bias, add_mask, layer["wo"],
            x2d.reshape(bsz, s, d), nh, dk).reshape(bsz * s, d)              # [M, D]
        x2d = pallas_norm_ffn_residual(x2d, layer["ln2"],
                                       layer["wi"], layer["wo_ff"])          # [M, D]

    # final RMSNorm + mean-pool (dim=1) + classifier, fused + batched into one epilogue kernel
    logits = pallas_final_pool_classify(x2d.reshape(bsz, s, d),
                                        params["final_ln"],
                                        params["cls_w"], params["cls_b"])    # [B, 64] f32
    return logits
    # TODO(synk): labels path (CrossEntropyLoss) omitted — forward is exercised with labels=None.


# ----------------------------- param init -----------------------------------

def init_params(key, cfg):
    d, nh, dk, f = cfg["d_model"], cfg["num_heads"], cfg["d_kv"], cfg["d_ff"]
    hd = nh * dk
    keys = iter(jax.random.split(key, 8 + 8 * cfg["num_layers"]))

    def nrm(shape, scale=0.05, dtype=COMPUTE_DTYPE):
        return (jax.random.normal(next(keys), shape, jnp.float32) * scale).astype(dtype)

    params = {
        "embed": nrm((cfg["vocab"], d), 0.5),
        "rel_bias": nrm((cfg["num_buckets"], nh), 0.1, jnp.float32),
        "final_ln": jnp.ones((d,), jnp.float32),
        "cls_w": nrm((d, 64)),
        "cls_b": nrm((64,), 0.01, jnp.float32),
        "layers": [],
    }
    for _ in range(cfg["num_layers"]):
        params["layers"].append({
            "ln1": jnp.ones((d,), jnp.float32),
            # packed Q/K/V projection: single [D, 3*H*dk] weight -> one MXU matmul per tile
            "wqkv": jnp.concatenate([nrm((d, hd)), nrm((d, hd)), nrm((d, hd))], axis=1),
            "wo": nrm((hd, d)),
            "ln2": jnp.ones((d,), jnp.float32),
            "wi": nrm((d, f)),
            "wo_ff": nrm((f, d)),
        })
    return params


# ----------------------------- main ------------------------------------------

if __name__ == "__main__":
    cfg = dict(vocab=100, d_model=32, num_heads=4, d_kv=8, d_ff=64,
               num_layers=2, num_buckets=32)
    B, S = 2, 16

    key = jax.random.PRNGKey(0)
    k_ids, k_params = jax.random.split(key)

    input_ids = jax.random.randint(k_ids, (B, S), 0, cfg["vocab"], dtype=jnp.int32)
    attention_mask = jnp.concatenate(
        [jnp.ones((1, S), jnp.float32),
         jnp.concatenate([jnp.ones((1, S - 6), jnp.float32),
                          jnp.zeros((1, 6), jnp.float32)], axis=1)],  # second example padded
        axis=0)

    params = init_params(k_params, cfg)

    # jit the whole forward so residual input_output_aliases act on internal buffers only.
    forward = jax.jit(lambda p, ids, mask: t5_encoder_classifier(p, ids, mask, cfg))

    logits = forward(params, input_ids, attention_mask)
    logits = jax.block_until_ready(logits)

    assert logits.shape == (B, 64)
    assert bool(jnp.all(jnp.isfinite(logits)))
    print("KERNEL_OK")
</pallas_src>

<mosaic_0001>
module attributes {stable_mosaic.version = 11 : i64} {
  func.func @_norm_qkv_kernel(%arg0: i32, %arg1: memref<16x32xbf16, #tpu.memory_space<vmem>>, %arg2: memref<1x32xf32, #tpu.memory_space<vmem>>, %arg3: memref<32x96xbf16, #tpu.memory_space<vmem>>, %arg4: memref<16x96xbf16, #tpu.memory_space<vmem>>) attributes {dimension_semantics = [#tpu.dimension_semantics<parallel>], iteration_bounds = array<i64: 2>, scalar_prefetch = 0 : i64, scratch_operands = 0 : i64, tpu.core_type = #tpu.core_type<tc>, window_params = [{transform_indices = @transform_0, window_bounds = array<i64: 16, 32>}, {pipeline_mode = #tpu.pipeline_mode<synchronous>, transform_indices = @transform_1, window_bounds = array<i64: 1, 32>}, {pipeline_mode = #tpu.pipeline_mode<synchronous>, transform_indices = @transform_2, window_bounds = array<i64: 32, 96>}, {transform_indices = @transform_3, window_bounds = array<i64: 16, 96>}]} {
    %c0 = arith.constant 0 : index
    %c0_0 = arith.constant 0 : index
    %0 = vector.load %arg1[%c0, %c0_0] : memref<16x32xbf16, #tpu.memory_space<vmem>>, vector<16x32xbf16>
    %1 = arith.extf %0 : vector<16x32xbf16> to vector<16x32xf32>
    %c0_1 = arith.constant 0 : index
    %c0_2 = arith.constant 0 : index
    %2 = vector.load %arg2[%c0_1, %c0_2] : memref<1x32xf32, #tpu.memory_space<vmem>>, vector<1x32xf32>
    %3 = arith.mulf %1, %1 : vector<16x32xf32>
    %cst = arith.constant dense<0.000000e+00> : vector<16xf32>
    %4 = vector.multi_reduction <add>, %3, %cst [1] : vector<16x32xf32> to vector<16xf32>
    %5 = vector.shape_cast %4 : vector<16xf32> to vector<16x1xf32>
    %cst_3 = arith.constant 3.200000e+01 : f32
    %6 = vector.broadcast %cst_3 : f32 to vector<16x1xf32>
    %7 = arith.divf %5, %6 : vector<16x1xf32>
    %cst_4 = arith.constant 9.99999997E-7 : f32
    %8 = vector.broadcast %cst_4 : f32 to vector<16x1xf32>
    %9 = arith.addf %7, %8 : vector<16x1xf32>
    %10 = math.rsqrt %9 : vector<16x1xf32>
    %11 = vector.broadcast %10 : vector<16x1xf32> to vector<16x32xf32>
    %12 = arith.mulf %1, %11 : vector<16x32xf32>
    %13 = vector.broadcast %2 : vector<1x32xf32> to vector<16x32xf32>
    %14 = arith.mulf %12, %13 : vector<16x32xf32>
    %15 = arith.truncf %14 : vector<16x32xf32> to vector<16x32xbf16>
    %c0_5 = arith.constant 0 : index
    %c0_6 = arith.constant 0 : index
    %16 = vector.load %arg3[%c0_5, %c0_6] : memref<32x96xbf16, #tpu.memory_space<vmem>>, vector<32x96xbf16>
    %cst_7 = arith.constant dense<0.000000e+00> : vector<16x96xf32>
    %17 = tpu.matmul %15, %16, %cst_7 {dimension_numbers = #tpu.dot_dimension_numbers<[1], [0], [0], [1], [0, 0, 1, 1], [], []>} : vector<16x32xbf16>, vector<32x96xbf16>, vector<16x96xf32> -> vector<16x96xf32>
    %18 = arith.truncf %17 : vector<16x96xf32> to vector<16x96xbf16>
    %c0_8 = arith.constant 0 : index
    %c0_9 = arith.constant 0 : index
    %19 = vector.load %arg4[%c0_8, %c0_9] : memref<16x96xbf16, #tpu.memory_space<vmem>>, vector<16x96xbf16>
    tpu.vector_store %arg4[%c0_8, %c0_9], %18 {strides = array<i32>} : memref<16x96xbf16, #tpu.memory_space<vmem>>, vector<16x96xbf16>,
    return
  }
  func.func @transform_0(%arg0: i32) -> (i32, i32) {
    %c0_i32 = arith.constant 0 : i32
    %c0_i32_0 = arith.constant 0 : i32
    return %arg0, %c0_i32 : i32, i32
  }
  func.func @transform_1(%arg0: i32) -> (i32, i32) {
    %c0_i32 = arith.constant 0 : i32
    %c0_i32_0 = arith.constant 0 : i32
    %c0_i32_1 = arith.constant 0 : i32
    return %c0_i32, %c0_i32_0 : i32, i32
  }
  func.func @transform_2(%arg0: i32) -> (i32, i32) {
    %c0_i32 = arith.constant 0 : i32
    %c0_i32_0 = arith.constant 0 : i32
    %c0_i32_1 = arith.constant 0 : i32
    return %c0_i32, %c0_i32_0 : i32, i32
  }
  func.func @transform_3(%arg0: i32) -> (i32, i32) {
    %c0_i32 = arith.constant 0 : i32
    %c0_i32_0 = arith.constant 0 : i32
    return %arg0, %c0_i32 : i32, i32
  }
}

module attributes {stable_mosaic.version = 11 : i64} {
  func.func @_norm_ffn_residual_kernel(%arg0: i32, %arg1: memref<16x32xbf16, #tpu.memory_space<vmem>>, %arg2: memref<1x32xf32, #tpu.memory_space<vmem>>, %arg3: memref<32x64xbf16, #tpu.memory_space<vmem>>, %arg4: memref<64x32xbf16, #tpu.memory_space<vmem>>, %arg5: memref<16x32xbf16, #tpu.memory_space<vmem>>) attributes {dimension_semantics = [#tpu.dimension_semantics<parallel>], iteration_bounds = array<i64: 2>, scalar_prefetch = 0 : i64, scratch_operands = 0 : i64, tpu.core_type = #tpu.core_type<tc>, window_params = [{transform_indices = @transform_0, window_bounds = array<i64: 16, 32>}, {pipeline_mode = #tpu.pipeline_mode<synchronous>, transform_indices = @transform_1, window_bounds = array<i64: 1, 32>}, {pipeline_mode = #tpu.pipeline_mode<synchronous>, transform_indices = @transform_2, window_bounds = array<i64: 32, 64>}, {pipeline_mode = #tpu.pipeline_mode<synchronous>, transform_indices = @transform_3, window_bounds = array<i64: 64, 32>}, {transform_indices = @transform_4, window_bounds = array<i64: 16, 32>}]} {
    %c0 = arith.constant 0 : index
    %c0_0 = arith.constant 0 : index
    %0 = vector.load %arg1[%c0, %c0_0] : memref<16x32xbf16, #tpu.memory_space<vmem>>, vector<16x32xbf16>
    %1 = arith.extf %0 : vector<16x32xbf16> to vector<16x32xf32>
    %c0_1 = arith.constant 0 : index
    %c0_2 = arith.constant 0 : index
    %2 = vector.load %arg2[%c0_1, %c0_2] : memref<1x32xf32, #tpu.memory_space<vmem>>, vector<1x32xf32>
    %3 = arith.mulf %1, %1 : vector<16x32xf32>
    %cst = arith.constant dense<0.000000e+00> : vector<16xf32>
    %4 = vector.multi_reduction <add>, %3, %cst [1] : vector<16x32xf32> to vector<16xf32>
    %5 = vector.shape_cast %4 : vector<16xf32> to vector<16x1xf32>
    %cst_3 = arith.constant 3.200000e+01 : f32
    %6 = vector.broadcast %cst_3 : f32 to vector<16x1xf32>
    %7 = arith.divf %5, %6 : vector<16x1xf32>
    %cst_4 = arith.constant 9.99999997E-7 : f32
    %8 = vector.broadcast %cst_4 : f32 to vector<16x1xf32>
    %9 = arith.addf %7, %8 : vector<16x1xf32>
    %10 = math.rsqrt %9 : vector<16x1xf32>
    %11 = vector.broadcast %10 : vector<16x1xf32> to vector<16x32xf32>
    %12 = arith.mulf %1, %11 : vector<16x32xf32>
    %13 = vector.broadcast %2 : vector<1x32xf32> to vector<16x32xf32>
    %14 = arith.mulf %12, %13 : vector<16x32xf32>
    %15 = arith.truncf %14 : vector<16x32xf32> to vector<16x32xbf16>
    %c0_5 = arith.constant 0 : index
    %c0_6 = arith.constant 0 : index
    %16 = vector.load %arg3[%c0_5, %c0_6] : memref<32x64xbf16, #tpu.memory_space<vmem>>, vector<32x64xbf16>
    %cst_7 = arith.constant dense<0.000000e+00> : vector<16x64xf32>
    %17 = tpu.matmul %15, %16, %cst_7 {dimension_numbers = #tpu.dot_dimension_numbers<[1], [0], [0], [1], [0, 0, 1, 1], [], []>} : vector<16x32xbf16>, vector<32x64xbf16>, vector<16x64xf32> -> vector<16x64xf32>
    %cst_8 = arith.constant 0.000000e+00 : f32
    %18 = vector.broadcast %cst_8 : f32 to vector<16x64xf32>
    %19 = arith.maximumf %17, %18 : vector<16x64xf32>
    %20 = arith.truncf %19 : vector<16x64xf32> to vector<16x64xbf16>
    %c0_9 = arith.constant 0 : index
    %c0_10 = arith.constant 0 : index
    %21 = vector.load %arg4[%c0_9, %c0_10] : memref<64x32xbf16, #tpu.memory_space<vmem>>, vector<64x32xbf16>
    %cst_11 = arith.constant dense<0.000000e+00> : vector<16x32xf32>
    %22 = tpu.matmul %20, %21, %cst_11 {dimension_numbers = #tpu.dot_dimension_numbers<[1], [0], [0], [1], [0, 0, 1, 1], [], []>} : vector<16x64xbf16>, vector<64x32xbf16>, vector<16x32xf32> -> vector<16x32xf32>
    %23 = arith.addf %1, %22 : vector<16x32xf32>
    %24 = arith.truncf %23 : vector<16x32xf32> to vector<16x32xbf16>
    %c0_12 = arith.constant 0 : index
    %c0_13 = arith.constant 0 : index
    %25 = vector.load %arg5[%c0_12, %c0_13] : memref<16x32xbf16, #tpu.memory_space<vmem>>, vector<16x32xbf16>
    tpu.vector_store %arg5[%c0_12, %c0_13], %24 {strides = array<i32>} : memref<16x32xbf16, #tpu.memory_space<vmem>>, vector<16x32xbf16>,
    return
  }
  func.func @transform_0(%arg0: i32) -> (i32, i32) {
    %c0_i32 = arith.constant 0 : i32
    %c0_i32_0 = arith.constant 0 : i32
    return %arg0, %c0_i32 : i32, i32
  }
  func.func @transform_1(%arg0: i32) -> (i32, i32) {
    %c0_i32 = arith.constant 0 : i32
    %c0_i32_0 = arith.constant 0 : i32
    %c0_i32_1 = arith.constant 0 : i32
    return %c0_i32, %c0_i32_0 : i32, i32
  }
  func.func @transform_2(%arg0: i32) -> (i32, i32) {
    %c0_i32 = arith.constant 0 : i32
    %c0_i32_0 = arith.constant 0 : i32
    %c0_i32_1 = arith.constant 0 : i32
    return %c0_i32, %c0_i32_0 : i32, i32
  }
  func.func @transform_3(%arg0: i32) -> (i32, i32) {
    %c0_i32 = arith.constant 0 : i32
    %c0_i32_0 = arith.constant 0 : i32
    %c0_i32_1 = arith.constant 0 : i32
    return %c0_i32, %c0_i32_0 : i32, i32
  }
  func.func @transform_4(%arg0: i32) -> (i32, i32) {
    %c0_i32 = arith.constant 0 : i32
    %c0_i32_0 = arith.constant 0 : i32
    return %arg0, %c0_i32 : i32, i32
  }
}

module attributes {stable_mosaic.version = 11 : i64} {
  func.func @_attention_outproj_res_kernel(%arg0: i32, %arg1: memref<1x16x96xbf16, #tpu.memory_space<vmem>>, %arg2: memref<1x4x16x16xbf16, #tpu.memory_space<vmem>>, %arg3: memref<1x1x1x16xf32, #tpu.memory_space<vmem>>, %arg4: memref<32x32xbf16, #tpu.memory_space<vmem>>, %arg5: memref<1x16x32xbf16, #tpu.memory_space<vmem>>, %arg6: memref<1x16x32xbf16, #tpu.memory_space<vmem>>, %arg7: memref<16x32xbf16, #tpu.memory_space<vmem>>) attributes {dimension_semantics = [#tpu.dimension_semantics<parallel>], iteration_bounds = array<i64: 2>, scalar_prefetch = 0 : i64, scratch_operands = 1 : i64, tpu.core_type = #tpu.core_type<tc>, window_params = [{transform_indices = @transform_0, window_bounds = array<i64: 1, 16, 96>}, {pipeline_mode = #tpu.pipeline_mode<synchronous>, transform_indices = @transform_1, window_bounds = array<i64: 1, 4, 16, 16>}, {transform_indices = @transform_2, window_bounds = array<i64: 1, 1, 1, 16>}, {pipeline_mode = #tpu.pipeline_mode<synchronous>, transform_indices = @transform_3, window_bounds = array<i64: 32, 32>}, {transform_indices = @transform_4, window_bounds = array<i64: 1, 16, 32>}, {transform_indices = @transform_5, window_bounds = array<i64: 1, 16, 32>}]} {
    %c0 = arith.constant 0 : index
    %c0_0 = arith.constant 0 : index
    %c0_1 = arith.constant 0 : index
    %c0_2 = arith.constant 0 : index
    %0 = vector.load %arg3[%c0, %c0_0, %c0_1, %c0_2] : memref<1x1x1x16xf32, #tpu.memory_space<vmem>>, vector<1x1x1x16xf32>
    %1 = vector.shape_cast %0 : vector<1x1x1x16xf32> to vector<1x16xf32>
    %c0_3 = arith.constant 0 : index
    %c0_4 = arith.constant 0 : index
    %c0_5 = arith.constant 0 : index
    %2 = vector.load %arg1[%c0_3, %c0_4, %c0_5] : memref<1x16x96xbf16, #tpu.memory_space<vmem>>, vector<1x16x8xbf16>
    %3 = vector.shape_cast %2 : vector<1x16x8xbf16> to vector<16x8xbf16>
    %c0_6 = arith.constant 0 : index
    %c0_7 = arith.constant 0 : index
    %c32 = arith.constant 32 : index
    %4 = vector.load %arg1[%c0_6, %c0_7, %c32] : memref<1x16x96xbf16, #tpu.memory_space<vmem>>, vector<1x16x8xbf16>
    %5 = vector.shape_cast %4 : vector<1x16x8xbf16> to vector<16x8xbf16>
    %c0_8 = arith.constant 0 : index
    %c0_9 = arith.constant 0 : index
    %c64 = arith.constant 64 : index
    %6 = vector.load %arg1[%c0_8, %c0_9, %c64] : memref<1x16x96xbf16, #tpu.memory_space<vmem>>, vector<1x16x8xbf16>
    %7 = vector.shape_cast %6 : vector<1x16x8xbf16> to vector<16x8xbf16>
    %cst = arith.constant dense<0.000000e+00> : vector<16x16xf32>
    %8 = tpu.matmul %3, %5, %cst {dimension_numbers = #tpu.dot_dimension_numbers<[1], [1], [0], [0], [0, 0, 1, 0], [], []>} : vector<16x8xbf16>, vector<16x8xbf16>, vector<16x16xf32> -> vector<16x16xf32>
    %c0_10 = arith.constant 0 : index
    %c0_11 = arith.constant 0 : index
    %c0_12 = arith.constant 0 : index
    %c0_13 = arith.constant 0 : index
    %9 = vector.load %arg2[%c0_10, %c0_11, %c0_12, %c0_13] : memref<1x4x16x16xbf16, #tpu.memory_space<vmem>>, vector<1x1x16x16xbf16>
    %10 = vector.shape_cast %9 : vector<1x1x16x16xbf16> to vector<16x16xbf16>
    %11 = arith.extf %10 : vector<16x16xbf16> to vector<16x16xf32>
    %12 = arith.addf %8, %11 : vector<16x16xf32>
    %13 = vector.broadcast %1 : vector<1x16xf32> to vector<16x16xf32>
    %14 = arith.addf %12, %13 : vector<16x16xf32>
    %cst_14 = arith.constant dense<0xFF800000> : vector<16xf32>
    %15 = vector.multi_reduction <maximumf>, %14, %cst_14 [1] : vector<16x16xf32> to vector<16xf32>
    %16 = vector.shape_cast %15 : vector<16xf32> to vector<16x1xf32>
    %17 = vector.broadcast %16 : vector<16x1xf32> to vector<16x16xf32>
    %18 = arith.subf %14, %17 : vector<16x16xf32>
    %19 = math.exp %18 : vector<16x16xf32>
    %cst_15 = arith.constant dense<0.000000e+00> : vector<16xf32>
    %20 = vector.multi_reduction <add>, %19, %cst_15 [1] : vector<16x16xf32> to vector<16xf32>
    %21 = vector.shape_cast %20 : vector<16xf32> to vector<16x1xf32>
    %22 = tpu.reciprocal %21 {approx = true} : vector<16x1xf32> -> vector<16x1xf32>
    %23 = vector.broadcast %22 : vector<16x1xf32> to vector<16x16xf32>
    %24 = arith.mulf %19, %23 : vector<16x16xf32>
    %25 = arith.truncf %24 : vector<16x16xf32> to vector<16x16xbf16>
    %cst_16 = arith.constant dense<0.000000e+00> : vector<16x8xf32>
    %26 = tpu.matmul %25, %7, %cst_16 {dimension_numbers = #tpu.dot_dimension_numbers<[1], [0], [0], [1], [0, 0, 1, 1], [], []>} : vector<16x16xbf16>, vector<16x8xbf16>, vector<16x8xf32> -> vector<16x8xf32>
    %27 = arith.truncf %26 : vector<16x8xf32> to vector<16x8xbf16>
    %c0_17 = arith.constant 0 : index
    %c0_18 = arith.constant 0 : index
    %28 = vector.load %arg7[%c0_17, %c0_18] : memref<16x32xbf16, #tpu.memory_space<vmem>>, vector<16x8xbf16>
    tpu.vector_store %arg7[%c0_17, %c0_18], %27 {strides = array<i32>} : memref<16x32xbf16, #tpu.memory_space<vmem>>, vector<16x8xbf16>,
    %c0_19 = arith.constant 0 : index
    %c0_20 = arith.constant 0 : index
    %c8 = arith.constant 8 : index
    %29 = vector.load %arg1[%c0_19, %c0_20, %c8] : memref<1x16x96xbf16, #tpu.memory_space<vmem>>, vector<1x16x8xbf16>
    %30 = vector.shape_cast %29 : vector<1x16x8xbf16> to vector<16x8xbf16>
    %c0_21 = arith.constant 0 : index
    %c0_22 = arith.constant 0 : index
    %c40 = arith.constant 40 : index
    %31 = vector.load %arg1[%c0_21, %c0_22, %c40] : memref<1x16x96xbf16, #tpu.memory_space<vmem>>, vector<1x16x8xbf16>
    %32 = vector.shape_cast %31 : vector<1x16x8xbf16> to vector<16x8xbf16>
    %c0_23 = arith.constant 0 : index
    %c0_24 = arith.constant 0 : index
    %c72 = arith.constant 72 : index
    %33 = vector.load %arg1[%c0_23, %c0_24, %c72] : memref<1x16x96xbf16, #tpu.memory_space<vmem>>, vector<1x16x8xbf16>
    %34 = vector.shape_cast %33 : vector<1x16x8xbf16> to vector<16x8xbf16>
    %cst_25 = arith.constant dense<0.000000e+00> : vector<16x16xf32>
    %35 = tpu.matmul %30, %32, %cst_25 {dimension_numbers = #tpu.dot_dimension_numbers<[1], [1], [0], [0], [0, 0, 1, 0], [], []>} : vector<16x8xbf16>, vector<16x8xbf16>, vector<16x16xf32> -> vector<16x16xf32>
    %c0_26 = arith.constant 0 : index
    %c1 = arith.constant 1 : index
    %c0_27 = arith.constant 0 : index
    %c0_28 = arith.constant 0 : index
    %36 = vector.load %arg2[%c0_26, %c1, %c0_27, %c0_28] : memref<1x4x16x16xbf16, #tpu.memory_space<vmem>>, vector<1x1x16x16xbf16>
    %37 = vector.shape_cast %36 : vector<1x1x16x16xbf16> to vector<16x16xbf16>
    %38 = arith.extf %37 : vector<16x16xbf16> to vector<16x16xf32>
    %39 = arith.addf %35, %38 : vector<16x16xf32>
    %40 = vector.broadcast %1 : vector<1x16xf32> to vector<16x16xf32>
    %41 = arith.addf %39, %40 : vector<16x16xf32>
    %cst_29 = arith.constant dense<0xFF800000> : vector<16xf32>
    %42 = vector.multi_reduction <maximumf>, %41, %cst_29 [1] : vector<16x16xf32> to vector<16xf32>
    %43 = vector.shape_cast %42 : vector<16xf32> to vector<16x1xf32>
    %44 = vector.broadcast %43 : vector<16x1xf32> to vector<16x16xf32>
    %45 = arith.subf %41, %44 : vector<16x16xf32>
    %46 = math.exp %45 : vector<16x16xf32>
    %cst_30 = arith.constant dense<0.000000e+00> : vector<16xf32>
    %47 = vector.multi_reduction <add>, %46, %cst_30 [1] : vector<16x16xf32> to vector<16xf32>
    %48 = vector.shape_cast %47 : vector<16xf32> to vector<16x1xf32>
    %49 = tpu.reciprocal %48 {approx = true} : vector<16x1xf32> -> vector<16x1xf32>
    %50 = vector.broadcast %49 : vector<16x1xf32> to vector<16x16xf32>
    %51 = arith.mulf %46, %50 : vector<16x16xf32>
    %52 = arith.truncf %51 : vector<16x16xf32> to vector<16x16xbf16>
    %cst_31 = arith.constant dense<0.000000e+00> : vector<16x8xf32>
    %53 = tpu.matmul %52, %34, %cst_31 {dimension_numbers = #tpu.dot_dimension_numbers<[1], [0], [0], [1], [0, 0, 1, 1], [], []>} : vector<16x16xbf16>, vector<16x8xbf16>, vector<16x8xf32> -> vector<16x8xf32>
    %54 = arith.truncf %53 : vector<16x8xf32> to vector<16x8xbf16>
    %c0_32 = arith.constant 0 : index
    %c8_33 = arith.constant 8 : index
    %55 = vector.load %arg7[%c0_32, %c8_33] : memref<16x32xbf16, #tpu.memory_space<vmem>>, vector<16x8xbf16>
    tpu.vector_store %arg7[%c0_32, %c8_33], %54 {strides = array<i32>} : memref<16x32xbf16, #tpu.memory_space<vmem>>, vector<16x8xbf16>,
    %c0_34 = arith.constant 0 : index
    %c0_35 = arith.constant 0 : index
    %c16 = arith.constant 16 : index
    %56 = vector.load %arg1[%c0_34, %c0_35, %c16] : memref<1x16x96xbf16, #tpu.memory_space<vmem>>, vector<1x16x8xbf16>
    %57 = vector.shape_cast %56 : vector<1x16x8xbf16> to vector<16x8xbf16>
    %c0_36 = arith.constant 0 : index
    %c0_37 = arith.constant 0 : index
    %c48 = arith.constant 48 : index
    %58 = vector.load %arg1[%c0_36, %c0_37, %c48] : memref<1x16x96xbf16, #tpu.memory_space<vmem>>, vector<1x16x8xbf16>
    %59 = vector.shape_cast %58 : vector<1x16x8xbf16> to vector<16x8xbf16>
    %c0_38 = arith.constant 0 : index
    %c0_39 = arith.constant 0 : index
    %c80 = arith.constant 80 : index
    %60 = vector.load %arg1[%c0_38, %c0_39, %c80] : memref<1x16x96xbf16, #tpu.memory_space<vmem>>, vector<1x16x8xbf16>
    %61 = vector.shape_cast %60 : vector<1x16x8xbf16> to vector<16x8xbf16>
    %cst_40 = arith.constant dense<0.000000e+00> : vector<16x16xf32>
    %62 = tpu.matmul %57, %59, %cst_40 {dimension_numbers = #tpu.dot_dimension_numbers<[1], [1], [0], [0], [0, 0, 1, 0], [], []>} : vector<16x8xbf16>, vector<16x8xbf16>, vector<16x16xf32> -> vector<16x16xf32>
    %c0_41 = arith.constant 0 : index
    %c2 = arith.constant 2 : index
    %c0_42 = arith.constant 0 : index
    %c0_43 = arith.constant 0 : index
    %63 = vector.load %arg2[%c0_41, %c2, %c0_42, %c0_43] : memref<1x4x16x16xbf16, #tpu.memory_space<vmem>>, vector<1x1x16x16xbf16>
    %64 = vector.shape_cast %63 : vector<1x1x16x16xbf16> to vector<16x16xbf16>
    %65 = arith.extf %64 : vector<16x16xbf16> to vector<16x16xf32>
    %66 = arith.addf %62, %65 : vector<16x16xf32>
    %67 = vector.broadcast %1 : vector<1x16xf32> to vector<16x16xf32>
    %68 = arith.addf %66, %67 : vector<16x16xf32>
    %cst_44 = arith.constant dense<0xFF800000> : vector<16xf32>
    %69 = vector.multi_reduction <maximumf>, %68, %cst_44 [1] : vector<16x16xf32> to vector<16xf32>
    %70 = vector.shape_cast %69 : vector<16xf32> to vector<16x1xf32>
    %71 = vector.broadcast %70 : vector<16x1xf32> to vector<16x16xf32>
    %72 = arith.subf %68, %71 : vector<16x16xf32>
    %73 = math.exp %72 : vector<16x16xf32>
    %cst_45 = arith.constant dense<0.000000e+00> : vector<16xf32>
    %74 = vector.multi_reduction <add>, %73, %cst_45 [1] : vector<16x16xf32> to vector<16xf32>
    %75 = vector.shape_cast %74 : vector<16xf32> to vector<16x1xf32>
    %76 = tpu.reciprocal %75 {approx = true} : vector<16x1xf32> -> vector<16x1xf32>
    %77 = vector.broadcast %76 : vector<16x1xf32> to vector<16x16xf32>
    %78 = arith.mulf %73, %77 : vector<16x16xf32>
    %79 = arith.truncf %78 : vector<16x16xf32> to vector<16x16xbf16>
    %cst_46 = arith.constant dense<0.000000e+00> : vector<16x8xf32>
    %80 = tpu.matmul %79, %61, %cst_46 {dimension_numbers = #tpu.dot_dimension_numbers<[1], [0], [0], [1], [0, 0, 1, 1], [], []>} : vector<16x16xbf16>, vector<16x8xbf16>, vector<16x8xf32> -> vector<16x8xf32>
    %81 = arith.truncf %80 : vector<16x8xf32> to vector<16x8xbf16>
    %c0_47 = arith.constant 0 : index
    %c16_48 = arith.constant 16 : index
    %82 = vector.load %arg7[%c0_47, %c16_48] : memref<16x32xbf16, #tpu.memory_space<vmem>>, vector<16x8xbf16>
    tpu.vector_store %arg7[%c0_47, %c16_48], %81 {strides = array<i32>} : memref<16x32xbf16, #tpu.memory_space<vmem>>, vector<16x8xbf16>,
    %c0_49 = arith.constant 0 : index
    %c0_50 = arith.constant 0 : index
    %c24 = arith.constant 24 : index
    %83 = vector.load %arg1[%c0_49, %c0_50, %c24] : memref<1x16x96xbf16, #tpu.memory_space<vmem>>, vector<1x16x8xbf16>
    %84 = vector.shape_cast %83 : vector<1x16x8xbf16> to vector<16x8xbf16>
    %c0_51 = arith.constant 0 : index
    %c0_52 = arith.constant 0 : index
    %c56 = arith.constant 56 : index
    %85 = vector.load %arg1[%c0_51, %c0_52, %c56] : memref<1x16x96xbf16, #tpu.memory_space<vmem>>, vector<1x16x8xbf16>
    %86 = vector.shape_cast %85 : vector<1x16x8xbf16> to vector<16x8xbf16>
    %c0_53 = arith.constant 0 : index
    %c0_54 = arith.constant 0 : index
    %c88 = arith.constant 88 : index
    %87 = vector.load %arg1[%c0_53, %c0_54, %c88] : memref<1x16x96xbf16, #tpu.memory_space<vmem>>, vector<1x16x8xbf16>
    %88 = vector.shape_cast %87 : vector<1x16x8xbf16> to vector<16x8xbf16>
    %cst_55 = arith.constant dense<0.000000e+00> : vector<16x16xf32>
    %89 = tpu.matmul %84, %86, %cst_55 {dimension_numbers = #tpu.dot_dimension_numbers<[1], [1], [0], [0], [0, 0, 1, 0], [], []>} : vector<16x8xbf16>, vector<16x8xbf16>, vector<16x16xf32> -> vector<16x16xf32>
    %c0_56 = arith.constant 0 : index
    %c3 = arith.constant 3 : index
    %c0_57 = arith.constant 0 : index
    %c0_58 = arith.constant 0 : index
    %90 = vector.load %arg2[%c0_56, %c3, %c0_57, %c0_58] : memref<1x4x16x16xbf16, #tpu.memory_space<vmem>>, vector<1x1x16x16xbf16>
    %91 = vector.shape_cast %90 : vector<1x1x16x16xbf16> to vector<16x16xbf16>
    %92 = arith.extf %91 : vector<16x16xbf16> to vector<16x16xf32>
    %93 = arith.addf %89, %92 : vector<16x16xf32>
    %94 = vector.broadcast %1 : vector<1x16xf32> to vector<16x16xf32>
    %95 = arith.addf %93, %94 : vector<16x16xf32>
    %cst_59 = arith.constant dense<0xFF800000> : vector<16xf32>
    %96 = vector.multi_reduction <maximumf>, %95, %cst_59 [1] : vector<16x16xf32> to vector<16xf32>
    %97 = vector.shape_cast %96 : vector<16xf32> to vector<16x1xf32>
    %98 = vector.broadcast %97 : vector<16x1xf32> to vector<16x16xf32>
    %99 = arith.subf %95, %98 : vector<16x16xf32>
    %100 = math.exp %99 : vector<16x16xf32>
    %cst_60 = arith.constant dense<0.000000e+00> : vector<16xf32>
    %101 = vector.multi_reduction <add>, %100, %cst_60 [1] : vector<16x16xf32> to vector<16xf32>
    %102 = vector.shape_cast %101 : vector<16xf32> to vector<16x1xf32>
    %103 = tpu.reciprocal %102 {approx = true} : vector<16x1xf32> -> vector<16x1xf32>
    %104 = vector.broadcast %103 : vector<16x1xf32> to vector<16x16xf32>
    %105 = arith.mulf %100, %104 : vector<16x16xf32>
    %106 = arith.truncf %105 : vector<16x16xf32> to vector<16x16xbf16>
    %cst_61 = arith.constant dense<0.000000e+00> : vector<16x8xf32>
    %107 = tpu.matmul %106, %88, %cst_61 {dimension_numbers = #tpu.dot_dimension_numbers<[1], [0], [0], [1], [0, 0, 1, 1], [], []>} : vector<16x16xbf16>, vector<16x8xbf16>, vector<16x8xf32> -> vector<16x8xf32>
    %108 = arith.truncf %107 : vector<16x8xf32> to vector<16x8xbf16>
    %c0_62 = arith.constant 0 : index
    %c24_63 = arith.constant 24 : index
    %109 = vector.load %arg7[%c0_62, %c24_63] : memref<16x32xbf16, #tpu.memory_space<vmem>>, vector<16x8xbf16>
    tpu.vector_store %arg7[%c0_62, %c24_63], %108 {strides = array<i32>} : memref<16x32xbf16, #tpu.memory_space<vmem>>, vector<16x8xbf16>,
    %c0_64 = arith.constant 0 : index
    %c0_65 = arith.constant 0 : index
    %110 = vector.load %arg7[%c0_64, %c0_65] : memref<16x32xbf16, #tpu.memory_space<vmem>>, vector<16x32xbf16>
    %c0_66 = arith.constant 0 : index
    %c0_67 = arith.constant 0 : index
    %111 = vector.load %arg4[%c0_66, %c0_67] : memref<32x32xbf16, #tpu.memory_space<vmem>>, vector<32x32xbf16>
    %cst_68 = arith.constant dense<0.000000e+00> : vector<16x32xf32>
    %112 = tpu.matmul %110, %111, %cst_68 {dimension_numbers = #tpu.dot_dimension_numbers<[1], [0], [0], [1], [0, 0, 1, 1], [], []>} : vector<16x32xbf16>, vector<32x32xbf16>, vector<16x32xf32> -> vector<16x32xf32>
    %c0_69 = arith.constant 0 : index
    %c0_70 = arith.constant 0 : index
    %c0_71 = arith.constant 0 : index
    %113 = vector.load %arg5[%c0_69, %c0_70, %c0_71] : memref<1x16x32xbf16, #tpu.memory_space<vmem>>, vector<1x16x32xbf16>
    %114 = vector.shape_cast %113 : vector<1x16x32xbf16> to vector<16x32xbf16>
    %115 = arith.extf %114 : vector<16x32xbf16> to vector<16x32xf32>
    %116 = arith.addf %115, %112 : vector<16x32xf32>
    %117 = arith.truncf %116 : vector<16x32xf32> to vector<16x32xbf16>
    %c0_72 = arith.constant 0 : index
    %c0_73 = arith.constant 0 : index
    %c0_74 = arith.constant 0 : index
    %118 = vector.load %arg6[%c0_72, %c0_73, %c0_74] : memref<1x16x32xbf16, #tpu.memory_space<vmem>>, vector<1x16x32xbf16>
    %119 = vector.shape_cast %118 : vector<1x16x32xbf16> to vector<16x32xbf16>
    %120 = vector.shape_cast %117 : vector<16x32xbf16> to vector<1x16x32xbf16>
    tpu.vector_store %arg6[%c0_72, %c0_73, %c0_74], %120 {strides = array<i32>} : memref<1x16x32xbf16, #tpu.memory_space<vmem>>, vector<1x16x32xbf16>,
    return
  }
  func.func @transform_0(%arg0: i32) -> (i32, i32, i32) {
    %c0_i32 = arith.constant 0 : i32
    %c0_i32_0 = arith.constant 0 : i32
    %c0_i32_1 = arith.constant 0 : i32
    return %arg0, %c0_i32, %c0_i32_0 : i32, i32, i32
  }
  func.func @transform_1(%arg0: i32) -> (i32, i32, i32, i32) {
    %c0_i32 = arith.constant 0 : i32
    %c0_i32_0 = arith.constant 0 : i32
    %c0_i32_1 = arith.constant 0 : i32
    %c0_i32_2 = arith.constant 0 : i32
    %c0_i32_3 = arith.constant 0 : i32
    return %c0_i32, %c0_i32_0, %c0_i32_1, %c0_i32_2 : i32, i32, i32, i32
  }
  func.func @transform_2(%arg0: i32) -> (i32, i32, i32, i32) {
    %c0_i32 = arith.constant 0 : i32
    %c0_i32_0 = arith.constant 0 : i32
    %c0_i32_1 = arith.constant 0 : i32
    %c0_i32_2 = arith.constant 0 : i32
    return %arg0, %c0_i32, %c0_i32_0, %c0_i32_1 : i32, i32, i32, i32
  }
  func.func @transform_3(%arg0: i32) -> (i32, i32) {
    %c0_i32 = arith.constant 0 : i32
    %c0_i32_0 = arith.constant 0 : i32
    %c0_i32_1 = arith.constant 0 : i32
    return %c0_i32, %c0_i32_0 : i32, i32
  }
  func.func @transform_4(%arg0: i32) -> (i32, i32, i32) {
    %c0_i32 = arith.constant 0 : i32
    %c0_i32_0 = arith.constant 0 : i32
    %c0_i32_1 = arith.constant 0 : i32
    return %arg0, %c0_i32, %c0_i32_0 : i32, i32, i32
  }
  func.func @transform_5(%arg0: i32) -> (i32, i32, i32) {
    %c0_i32 = arith.constant 0 : i32
    %c0_i32_0 = arith.constant 0 : i32
    %c0_i32_1 = arith.constant 0 : i32
    return %arg0, %c0_i32, %c0_i32_0 : i32, i32, i32
  }
}

module attributes {stable_mosaic.version = 11 : i64} {
  func.func @_final_pool_cls_kernel(%arg0: i32, %arg1: memref<2x16x32xbf16, #tpu.memory_space<vmem>>, %arg2: memref<1x32xf32, #tpu.memory_space<vmem>>, %arg3: memref<32x64xbf16, #tpu.memory_space<vmem>>, %arg4: memref<1x64xf32, #tpu.memory_space<vmem>>, %arg5: memref<2x64xf32, #tpu.memory_space<vmem>>) attributes {dimension_semantics = [#tpu.dimension_semantics<arbitrary>], iteration_bounds = array<i64: 1>, scalar_prefetch = 0 : i64, scratch_operands = 0 : i64, tpu.core_type = #tpu.core_type<tc>, window_params = [{pipeline_mode = #tpu.pipeline_mode<synchronous>, transform_indices = @transform_0, window_bounds = array<i64: 2, 16, 32>}, {pipeline_mode = #tpu.pipeline_mode<synchronous>, transform_indices = @transform_1, window_bounds = array<i64: 1, 32>}, {pipeline_mode = #tpu.pipeline_mode<synchronous>, transform_indices = @transform_2, window_bounds = array<i64: 32, 64>}, {pipeline_mode = #tpu.pipeline_mode<synchronous>, transform_indices = @transform_3, window_bounds = array<i64: 1, 64>}, {pipeline_mode = #tpu.pipeline_mode<synchronous>, transform_indices = @transform_4, window_bounds = array<i64: 2, 64>}]} {
    %c0 = arith.constant 0 : index
    %c0_0 = arith.constant 0 : index
    %c0_1 = arith.constant 0 : index
    %0 = vector.load %arg1[%c0, %c0_0, %c0_1] : memref<2x16x32xbf16, #tpu.memory_space<vmem>>, vector<2x16x32xbf16>
    %1 = arith.extf %0 : vector<2x16x32xbf16> to vector<2x16x32xf32>
    %c0_2 = arith.constant 0 : index
    %c0_3 = arith.constant 0 : index
    %2 = vector.load %arg2[%c0_2, %c0_3] : memref<1x32xf32, #tpu.memory_space<vmem>>, vector<1x32xf32>
    %3 = arith.mulf %1, %1 : vector<2x16x32xf32>
    %cst = arith.constant dense<0.000000e+00> : vector<2x16xf32>
    %4 = vector.multi_reduction <add>, %3, %cst [2] : vector<2x16x32xf32> to vector<2x16xf32>
    %5 = vector.shape_cast %4 : vector<2x16xf32> to vector<2x16x1xf32>
    %cst_4 = arith.constant 3.200000e+01 : f32
    %6 = vector.broadcast %cst_4 : f32 to vector<2x16x1xf32>
    %7 = arith.divf %5, %6 : vector<2x16x1xf32>
    %cst_5 = arith.constant 9.99999997E-7 : f32
    %8 = vector.broadcast %cst_5 : f32 to vector<2x16x1xf32>
    %9 = arith.addf %7, %8 : vector<2x16x1xf32>
    %10 = math.rsqrt %9 : vector<2x16x1xf32>
    %11 = vector.broadcast %10 : vector<2x16x1xf32> to vector<2x16x32xf32>
    %12 = arith.mulf %1, %11 : vector<2x16x32xf32>
    %13 = vector.shape_cast %2 : vector<1x32xf32> to vector<1x1x32xf32>
    %14 = vector.broadcast %13 : vector<1x1x32xf32> to vector<2x16x32xf32>
    %15 = arith.mulf %12, %14 : vector<2x16x32xf32>
    %cst_6 = arith.constant dense<0.000000e+00> : vector<2x32xf32>
    %16 = vector.multi_reduction <add>, %15, %cst_6 [1] : vector<2x16x32xf32> to vector<2x32xf32>
    %cst_7 = arith.constant 1.600000e+01 : f32
    %17 = vector.broadcast %cst_7 : f32 to vector<2x32xf32>
    %18 = arith.divf %16, %17 : vector<2x32xf32>
    %19 = arith.truncf %18 : vector<2x32xf32> to vector<2x32xbf16>
    %c0_8 = arith.constant 0 : index
    %c0_9 = arith.constant 0 : index
    %20 = vector.load %arg3[%c0_8, %c0_9] : memref<32x64xbf16, #tpu.memory_space<vmem>>, vector<32x64xbf16>
    %cst_10 = arith.constant dense<0.000000e+00> : vector<2x64xf32>
    %21 = tpu.matmul %19, %20, %cst_10 {dimension_numbers = #tpu.dot_dimension_numbers<[1], [0], [0], [1], [0, 0, 1, 1], [], []>} : vector<2x32xbf16>, vector<32x64xbf16>, vector<2x64xf32> -> vector<2x64xf32>
    %c0_11 = arith.constant 0 : index
    %c0_12 = arith.constant 0 : index
    %22 = vector.load %arg4[%c0_11, %c0_12] : memref<1x64xf32, #tpu.memory_space<vmem>>, vector<1x64xf32>
    %23 = vector.broadcast %22 : vector<1x64xf32> to vector<2x64xf32>
    %24 = arith.addf %21, %23 : vector<2x64xf32>
    %c0_13 = arith.constant 0 : index
    %c0_14 = arith.constant 0 : index
    %25 = vector.load %arg5[%c0_13, %c0_14] : memref<2x64xf32, #tpu.memory_space<vmem>>, vector<2x64xf32>
    tpu.vector_store %arg5[%c0_13, %c0_14], %24 {strides = array<i32>} : memref<2x64xf32, #tpu.memory_space<vmem>>, vector<2x64xf32>,
    return
  }
  func.func @transform_0(%arg0: i32) -> (i32, i32, i32) {
    %c0_i32 = arith.constant 0 : i32
    %c0_i32_0 = arith.constant 0 : i32
    %c0_i32_1 = arith.constant 0 : i32
    %c0_i32_2 = arith.constant 0 : i32
    return %c0_i32, %c0_i32_0, %c0_i32_1 : i32, i32, i32
  }
  func.func @transform_1(%arg0: i32) -> (i32, i32) {
    %c0_i32 = arith.constant 0 : i32
    %c0_i32_0 = arith.constant 0 : i32
    %c0_i32_1 = arith.constant 0 : i32
    return %c0_i32, %c0_i32_0 : i32, i32
  }
  func.func @transform_2(%arg0: i32) -> (i32, i32) {
    %c0_i32 = arith.constant 0 : i32
    %c0_i32_0 = arith.constant 0 : i32
    %c0_i32_1 = arith.constant 0 : i32
    return %c0_i32, %c0_i32_0 : i32, i32
  }
  func.func @transform_3(%arg0: i32) -> (i32, i32) {
    %c0_i32 = arith.constant 0 : i32
    %c0_i32_0 = arith.constant 0 : i32
    %c0_i32_1 = arith.constant 0 : i32
    return %c0_i32, %c0_i32_0 : i32, i32
  }
  func.func @transform_4(%arg0: i32) -> (i32, i32) {
    %c0_i32 = arith.constant 0 : i32
    %c0_i32_0 = arith.constant 0 : i32
    %c0_i32_1 = arith.constant 0 : i32
    return %c0_i32, %c0_i32_0 : i32, i32
  }
}

</mosaic_0001>

<llo_original>
// kernel: _lambda_.7
$region0: #{_lambda_.7}
  #allocation0 [shape = 'u32[]', space=smem, size = 0x4, offset = 0x4, fixed_abs, tag = 'smem constant byte address 0x4 - core index']
  #allocation1 [shape = 'u32[144,128]{1,0:T(1,128)}', space=vmem, size = 0x12000, scoped, tag = 'internal scratch']
  %s0 = inlined_call_operand.vmem [shape: bf16[32,32], index: 0, kind: input, shape index: {}]
  %s1 = inlined_call_operand.vmem [shape: f32[1,32], index: 1, kind: input, shape index: {}]
  %s2 = inlined_call_operand.vmem [shape: bf16[32,96], index: 2, kind: input, shape index: {}]
  %s3 = inlined_call_operand.vmem [shape: bf16[32,96], index: 3, kind: output, shape index: {}]
  %s4 = sld [smem:[#allocation0]]
  $region45: #{_lambda_.7} parent=0
    _
  %s6 = ssub.s32 1, %s4
  %s7 = scalar_select 0, %s6, %s4
  loop: start=0, step=1, limit=4
  $region2: #{_lambda_.7} parent=0 // loop_pre_header
    _
  $region3: #{_lambda_.7} parent=0 // loop_header
    %s9 = sphi 0, %s13
    %p10 = scmp.ge.s32.totalorder %s9, 4
    %s19 = sphi 0, %s21
    %s22 = sphi 0, %s19
    %s23 = sphi 0, %s22
    %s39 = sphi 0, %s23
    %s43 = sphi 0, %s43
    %s45 = sphi 0, %s43
    %s46 = sphi 0, %s45
    %s60 = sphi 0, %s46
    %s64 = sphi 0, %s64
    %s66 = sphi 0, %s64
    %s67 = sphi 0, %s66
    %s81 = sphi 0, %s67
    %s87 = sphi 0, %s89
    %s90 = sphi 0, %s87
    %s91 = sphi 0, %s90
    %s107 = sphi 0, %s91
  $region4: #{_lambda_.7} parent=0 // loop_header_branch
    %12 = sbr.rel (%p10) target = $region8
  $region5: #{_lambda_.7} parent=0 // loop_body
    %s14 = ssub.s32 %s9, 1
    %s15 = ssub.s32 %s9, 2
    %s16 = sadd.s32 %s9, 1
    %s17 = ssub.s32 %s9, %s16
    %p18 = scmp.eq.s32.totalorder %s17, 0
    %s20 = sadd.s32 %s19, 1
    %s21 = scalar_select %p18, %s19, %s20
    %p24 = pneg %p18
    %p25 = scmp.eq.s32.totalorder %s9, 1
    %p26 = por %p24, %p25
    %p27 = scmp.ne.s32.totalorder %s19, %s22
    %p28 = scmp.eq.s32.totalorder %s9, 0
    %p29 = por %p27, %p28
    %p30 = scmp.ne.s32.totalorder %s19, %s22
    %p31 = scmp.eq.s32.totalorder %s14, 1
    %p32 = por %p30, %p31
    %p33 = scmp.ne.s32.totalorder %s22, %s23
    %p34 = scmp.eq.s32.totalorder %s14, 0
    %p35 = por %p33, %p34
    %p36 = scmp.ne.s32.totalorder %s22, %s23
    %p37 = scmp.eq.s32.totalorder %s15, 1
    %p38 = por %p36, %p37
    %p40 = scmp.ne.s32.totalorder %s23, %s39
    %p41 = scmp.eq.s32.totalorder %s15, 0
    %p42 = por %p40, %p41
    %s44 = sadd.s32 %s43, 1
    %p47 = scmp.eq.s32.totalorder %s9, 1
    %p48 = scmp.ne.s32.totalorder %s43, %s45
    %p49 = scmp.eq.s32.totalorder %s9, 0
    %p50 = por %p48, %p49
    %p51 = scmp.ne.s32.totalorder %s43, %s45
    %p52 = scmp.eq.s32.totalorder %s14, 1
    %p53 = por %p51, %p52
    %p54 = scmp.ne.s32.totalorder %s45, %s46
    %p55 = scmp.eq.s32.totalorder %s14, 0
    %p56 = por %p54, %p55
    %p57 = scmp.ne.s32.totalorder %s45, %s46
    %p58 = scmp.eq.s32.totalorder %s15, 1
    %p59 = por %p57, %p58
    %p61 = scmp.ne.s32.totalorder %s46, %s60
    %p62 = scmp.eq.s32.totalorder %s15, 0
    %p63 = por %p61, %p62
    %s65 = sadd.s32 %s64, 1
    %p68 = scmp.eq.s32.totalorder %s9, 1
    %p69 = scmp.ne.s32.totalorder %s64, %s66
    %p70 = scmp.eq.s32.totalorder %s9, 0
    %p71 = por %p69, %p70
    %p72 = scmp.ne.s32.totalorder %s64, %s66
    %p73 = scmp.eq.s32.totalorder %s14, 1
    %p74 = por %p72, %p73
    %p75 = scmp.ne.s32.totalorder %s66, %s67
    %p76 = scmp.eq.s32.totalorder %s14, 0
    %p77 = por %p75, %p76
    %p78 = scmp.ne.s32.totalorder %s66, %s67
    %p79 = scmp.eq.s32.totalorder %s15, 1
    %p80 = por %p78, %p79
    %p82 = scmp.ne.s32.totalorder %s67, %s81
    %p83 = scmp.eq.s32.totalorder %s15, 0
    %p84 = por %p82, %p83
    %s85 = ssub.s32 %s9, %s16
    %p86 = scmp.eq.s32.totalorder %s85, 0
    %s88 = sadd.s32 %s87, 1
    %s89 = scalar_select %p86, %s87, %s88
    %p92 = pneg %p86
    %p93 = scmp.eq.s32.totalorder %s9, 1
    %p94 = por %p92, %p93
    %p95 = scmp.ne.s32.totalorder %s87, %s90
    %p96 = scmp.eq.s32.totalorder %s9, 0
    %p97 = por %p95, %p96
    %p98 = scmp.ne.s32.totalorder %s87, %s90
    %p99 = scmp.eq.s32.totalorder %s14, 1
    %p100 = por %p98, %p99
    %p101 = scmp.ne.s32.totalorder %s90, %s91
    %p102 = scmp.eq.s32.totalorder %s14, 0
    %p103 = por %p101, %p102
    %p104 = scmp.ne.s32.totalorder %s90, %s91
    %p105 = scmp.eq.s32.totalorder %s15, 1
    %p106 = por %p104, %p105
    %p108 = scmp.ne.s32.totalorder %s91, %s107
    %p109 = scmp.eq.s32.totalorder %s15, 0
    %p110 = por %p108, %p109
    %p111 = scmp.le.s32.totalorder 1, %s9
    %p112 = scmp.lt.s32.totalorder %s9, 3
    %p113 = pnand %p111, %p112
    %p114 = pneg %p113
    // Predicated region
    $region9: #{_lambda_.7} parent=5 // pred_check
      _
    $region10: #{_lambda_.7} parent=5 // pred_check_branch
      %116 = sbr.rel (%p113) target = $region12
    $region11: #{_lambda_.7} parent=5 // pred_region
      %s117 = ssub.s32 %s9, 1
      // Predicated region
      $region13: #{_lambda_.7} parent=11 // pred_check
        %p118 = pneg %p56
      $region14: #{_lambda_.7} parent=11 // pred_check_branch
        %120 = sbr.rel (%p118) target = $region16
      $region15: #{_lambda_.7} parent=11 // pred_region
        _
      $region16: #{_lambda_.7} parent=11 // pred_fallthru
        _
      // Predicated region
      $region17: #{_lambda_.7} parent=11 // pred_check
        %p121 = pneg %p77
      $region18: #{_lambda_.7} parent=11 // pred_check_branch
        %123 = sbr.rel (%p121) target = $region20
      $region19: #{_lambda_.7} parent=11 // pred_region
        _
      $region20: #{_lambda_.7} parent=11 // pred_fallthru
        _
    $region12: #{_lambda_.7} parent=5 // pred_fallthru
      _
    %p124 = scmp.lt.s32.totalorder %s9, 2
    // Predicated region
    $region21: #{_lambda_.7} parent=5 // pred_check
      %p125 = pneg %p124
    $region22: #{_lambda_.7} parent=5 // pred_check_branch
      %127 = sbr.rel (%p125) target = $region24
    $region23: #{_lambda_.7} parent=5 // pred_region
      // Predicated region
      $region25: #{_lambda_.7} parent=23 // pred_check
        %p128 = pneg %p29
      $region26: #{_lambda_.7} parent=23 // pred_check_branch
        %130 = sbr.rel (%p128) target = $region28
      $region27: #{_lambda_.7} parent=23 // pred_region
        %s131 = smul.u32 2, %s9
        %p132 = scmp.lt.s32.totalorder %s131, 3
        %s133 = scalar_select %p132, %s131, 3
        %s134 = smul.addr %s133, 4
        %s135 = scalar_lea.vmem %s0, %s134
        %s136 = smul.u32 2, %s9
      $region28: #{_lambda_.7} parent=23 // pred_fallthru
        _
    $region24: #{_lambda_.7} parent=5 // pred_fallthru
      _
    %p137 = scmp.le.s32.totalorder 1, %s9
    %p138 = scmp.lt.s32.totalorder %s9, 3
    %p139 = pnand %p137, %p138
    %p140 = pneg %p139
    // Predicated region
    $region29: #{_lambda_.7} parent=5 // pred_check
      _
    $region30: #{_lambda_.7} parent=5 // pred_check_branch
      %142 = sbr.rel (%p139) target = $region32
    $region31: #{_lambda_.7} parent=5 // pred_region
      %s143 = ssub.s32 %s9, 1
      %s144 = smul.u32 2, %s14
      %p145 = scmp.lt.s32.totalorder %s144, 3
      %s146 = scalar_select %p145, %s144, 3
      %s147 = smul.addr %s146, 4
      %s148 = scalar_lea.vmem %s0, %s147
      %p149 = pneg %p35
      %p150 = pneg %p32
      %p151 = pneg %p56
      %p152 = pneg %p53
      %p153 = pneg %p77
      %p154 = pneg %p74
      %p155 = pneg %p103
      %p156 = pneg %p100
      %s157 = smul.u32 2, %s14
      %p158 = scmp.lt.s32.totalorder %s157, 3
      %s159 = scalar_select %p158, %s157, 3
      %s160 = smul.addr %s159, 4
      %s161 = scalar_lea.vmem %s3, %s160
      %s162 = smul.u32 2, %s14
      %p163 = scmp.lt.s32.totalorder %s162, 3
      %s164 = scalar_select %p163, %s162, 3
      %s165 = smul.addr %s164, 4
      %s166 = scalar_lea.vmem %s0, %s165
      %s167 = smul.u32 2, %s14
      %s168 = smul.u32 2, %s14
      %p169 = scmp.lt.s32.totalorder %s168, 3
      %s170 = scalar_select %p169, %s168, 3
      %s171 = smul.addr %s170, 4
      %s172 = scalar_lea.vmem %s3, %s171
      %s173 = smul.u32 2, %s14
      %v175 = vld [vmem:[%s166] sm:$0xf]
      %v176 = vld [vmem:[%s166 + $0x4] sm:$0xf]
      %v177 = vunpack.c.l.bf16 %v175
      %v178 = vunpack.c.l.bf16 %v176
      %v179 = vld [vmem:[%s1] sm:$0x1]
      %v180 = vmul.f32 %v177, %v177
      %v181 = vmul.f32 %v178, %v178
      %vm182 = vcmask 261120
      %v183 = vsel %vm182, %v180, 0.0
      %184 = vadd.xlane.f32.xlu0 %v183
      %v185 = vpop.xlane.xlu0 %184
      %v186 = vsel %vm182, %v181, 0.0
      %187 = vadd.xlane.f32.xlu0 %v186
      %v188 = vpop.xlane.xlu0 %187
      %v189 = vrcp.pop 32.0
      %v190 = vmul.f32 %v185, %v189
      %v191 = vmul.f32 %v188, %v189
      %v192 = vadd.f32 %v190, 1e-06
      %v193 = vadd.f32 %v191, 1e-06
      %v194 = vrsqrt.pop %v192
      %v195 = vrsqrt.pop %v193
      %v196 = vmul.f32 %v177, %v194
      %v197 = vmul.f32 %v178, %v195
      %v199 = vlaneseq
      %v200 = vshrl.u32 %v199, 7
      %v201 = vsub.s32 0, %v200
      %v202 = vrot.slane %v179, %v201
      %v204 = vmul.f32 %v196, %v202
      %v205 = vmul.f32 %v197, %v202
      %v206 = vpack.c.bf16 %v205, %v204
      %v207 = vld [vmem:[%s2] sm:$0xf]
      %v208 = vld [vmem:[%s2 + $0x4] sm:$0xf]
      %v209 = vld [vmem:[%s2 + $0x8] sm:$0xf]
      %v210 = vld [vmem:[%s2 + $0xc] sm:$0xf]
      %v215 = vunpack.c.l.b16 %v207
      %v216 = vunpack.c.l.b16 %v208
      %v217 = vunpack.c.l.b16 %v209
      %v218 = vunpack.c.l.b16 %v210
      %v219 = vpack.c.b16 %v216, %v215
      %v220 = vpack.c.b16 %v218, %v217
      %v224 = vsel %vm182, %v206, 0
      %226 = vmatprep.subr.bf16.mxu0 0
      %227 = vmatpush1.bf16.msra.mxu0 %v219
      %228 = vmatprep.subr.bf16.mxu0 0
      %229 = vmatpush1.bf16.msra.mxu0 %v220
      %230 = vmatprep.subr.bf16.mxu0 0
      %231 = vmatpush1.bf16.msra.mxu0 0
      %232 = vmatprep.subr.bf16.mxu0 0
      %233 = vmatpush1.bf16.msra.mxu0 0
      %234 = vmatprep.subr.bf16.mxu0 0
      %235 = vmatpush1.bf16.msra.mxu0 0
      %236 = vmatprep.subr.bf16.mxu0 0
      %237 = vmatpush1.bf16.msra.mxu0 0
      %238 = vmatprep.subr.bf16.mxu0 0
      %239 = vmatpush1.bf16.msra.mxu0 0
      %240 = vmatprep.subr.bf16.mxu0 0
      %241 = vmatpush1.bf16.msra.mxu0 0
      %242 = vmatprep.subr.bf16.mxu0 0
      %243 = vmatpush1.bf16.msra.mxu0 0
      %244 = vmatprep.subr.bf16.mxu0 0
      %245 = vmatpush1.bf16.msra.mxu0 0
      %246 = vmatprep.subr.bf16.mxu0 0
      %247 = vmatpush1.bf16.msra.mxu0 0
      %248 = vmatprep.subr.bf16.mxu0 0
      %249 = vmatpush1.bf16.msra.mxu0 0
      %250 = vmatprep.subr.bf16.mxu0 0
      %251 = vmatpush1.bf16.msra.mxu0 0
      %252 = vmatprep.subr.bf16.mxu0 0
      %253 = vmatpush1.bf16.msra.mxu0 0
      %254 = vmatprep.subr.bf16.mxu0 0
      %255 = vmatpush1.bf16.msra.mxu0 0
      %256 = vmatprep.subr.bf16.mxu0 0
      %257 = vmatpush1.bf16.msra.mxu0 0
      %258 = vmatprep.mubr.bf16.mxu0 0
      %259 = vmatmul.mubr.bf16.gmra.mrb[0].mxu0 %v224
      %v260 = vpop.f32.mrb[0].mxu0
      %v261 = vadd.f32 0.0, %v260
      %v262 = vpop.f32.mrb[0].mxu0
      %v263 = vpop.f32.mrb[0].mxu0
      %v264 = vadd.f32 0.0, %v263
      %v265 = vpop.f32.mrb[0].mxu0
      %266 = vdwg.mxu0
      %v267 = vpack.c.bf16 %v264, %v261
      %v269 = vunpack.c.l.b16 %v267
      %v270 = vunpack.c.h.b16 %v267
      %v271 = vpack.c.b16 %v269, %v269
      %v272 = vpack.c.b16 %v270, %v270
      %vm275 = vcmask 781312
      %276 = vst.msk [vmem:[%s172] sm:$0xf] %vm275, %v271
      %277 = vst.msk [vmem:[%s172 + $0x4] sm:$0xf] %vm275, %v272
      %s278 = smul.u32 2, %s14
      %p279 = scmp.lt.s32.totalorder %s278, 3
      %s280 = scalar_select %p279, %s278, 3
      %s281 = smul.addr %s280, 4
      %s282 = scalar_lea.vmem %s3, %s281
      // Predicated region
      $region33: #{_lambda_.7} parent=31 // pred_check
        %p283 = pneg %p100
      $region34: #{_lambda_.7} parent=31 // pred_check_branch
        %285 = sbr.rel (%p283) target = $region36
      $region35: #{_lambda_.7} parent=31 // pred_region
        %s286 = smul.u32 2, %s14
      $region36: #{_lambda_.7} parent=31 // pred_fallthru
        _
    $region32: #{_lambda_.7} parent=5 // pred_fallthru
      _
    %p287 = scmp.le.s32.totalorder 2, %s9
    // Predicated region
    $region37: #{_lambda_.7} parent=5 // pred_check
      %p288 = pneg %p287
    $region38: #{_lambda_.7} parent=5 // pred_check_branch
      %290 = sbr.rel (%p288) target = $region40
    $region39: #{_lambda_.7} parent=5 // pred_region
      %s291 = ssub.s32 %s9, 2
      // Predicated region
      $region41: #{_lambda_.7} parent=39 // pred_check
        %p292 = pneg %p106
      $region42: #{_lambda_.7} parent=39 // pred_check_branch
        %294 = sbr.rel (%p292) target = $region44
      $region43: #{_lambda_.7} parent=39 // pred_region
        %s295 = smul.u32 2, %s15
        %p296 = scmp.lt.s32.totalorder %s295, 3
        %s297 = scalar_select %p296, %s295, 3
        %s298 = smul.addr %s297, 4
        %s299 = scalar_lea.vmem %s3, %s298
      $region44: #{_lambda_.7} parent=39 // pred_fallthru
        _
    $region40: #{_lambda_.7} parent=5 // pred_fallthru
      _
  $region6: #{_lambda_.7} parent=0 // loop_footer
    %s13 = sadd.s32 1, %s9
  $region7: #{_lambda_.7} parent=0 // loop_footer_branch
    %8 = sbr.rel target = $region3
  $region8: #{_lambda_.7} parent=0 // loop_exit
    _

// kernel: _lambda_.9
$region0: #{_lambda_.9}
  #allocation0 [shape = 'u32[]', space=smem, size = 0x4, offset = 0x4, fixed_abs, tag = 'smem constant byte address 0x4 - core index']
  #allocation1 [shape = 'u32[144,128]{1,0:T(1,128)}', space=vmem, size = 0x12000, scoped, tag = 'internal scratch']
  %s0 = inlined_call_operand.vmem [shape: bf16[32,32], index: 0, kind: input, shape index: {}, may-alias: {0,4}]
  %s1 = inlined_call_operand.vmem [shape: f32[1,32], index: 1, kind: input, shape index: {}]
  %s2 = inlined_call_operand.vmem [shape: bf16[32,64], index: 2, kind: input, shape index: {}]
  %s3 = inlined_call_operand.vmem [shape: bf16[64,32], index: 3, kind: input, shape index: {}]
  %s4 = inlined_call_operand.vmem [shape: bf16[32,32], index: 4, kind: output, shape index: {}, may-alias: {0,4}]
  %s5 = sld [smem:[#allocation0]]
  $region49: #{_lambda_.9} parent=0
    _
  %s7 = ssub.s32 1, %s5
  %s8 = scalar_select 0, %s7, %s5
  loop: start=0, step=1, limit=4
  $region2: #{_lambda_.9} parent=0 // loop_pre_header
    _
  $region3: #{_lambda_.9} parent=0 // loop_header
    %s10 = sphi 0, %s14
    %p11 = scmp.ge.s32.totalorder %s10, 4
    %s20 = sphi 0, %s22
    %s23 = sphi 0, %s20
    %s24 = sphi 0, %s23
    %s40 = sphi 0, %s24
    %s44 = sphi 0, %s44
    %s46 = sphi 0, %s44
    %s47 = sphi 0, %s46
    %s61 = sphi 0, %s47
    %s65 = sphi 0, %s65
    %s67 = sphi 0, %s65
    %s68 = sphi 0, %s67
    %s82 = sphi 0, %s68
    %s86 = sphi 0, %s86
    %s88 = sphi 0, %s86
    %s89 = sphi 0, %s88
    %s103 = sphi 0, %s89
    %s109 = sphi 0, %s111
    %s112 = sphi 0, %s109
    %s113 = sphi 0, %s112
    %s129 = sphi 0, %s113
  $region4: #{_lambda_.9} parent=0 // loop_header_branch
    %13 = sbr.rel (%p11) target = $region8
  $region5: #{_lambda_.9} parent=0 // loop_body
    %s15 = ssub.s32 %s10, 1
    %s16 = ssub.s32 %s10, 2
    %s17 = sadd.s32 %s10, 1
    %s18 = ssub.s32 %s10, %s17
    %p19 = scmp.eq.s32.totalorder %s18, 0
    %s21 = sadd.s32 %s20, 1
    %s22 = scalar_select %p19, %s20, %s21
    %p25 = pneg %p19
    %p26 = scmp.eq.s32.totalorder %s10, 1
    %p27 = por %p25, %p26
    %p28 = scmp.ne.s32.totalorder %s20, %s23
    %p29 = scmp.eq.s32.totalorder %s10, 0
    %p30 = por %p28, %p29
    %p31 = scmp.ne.s32.totalorder %s20, %s23
    %p32 = scmp.eq.s32.totalorder %s15, 1
    %p33 = por %p31, %p32
    %p34 = scmp.ne.s32.totalorder %s23, %s24
    %p35 = scmp.eq.s32.totalorder %s15, 0
    %p36 = por %p34, %p35
    %p37 = scmp.ne.s32.totalorder %s23, %s24
    %p38 = scmp.eq.s32.totalorder %s16, 1
    %p39 = por %p37, %p38
    %p41 = scmp.ne.s32.totalorder %s24, %s40
    %p42 = scmp.eq.s32.totalorder %s16, 0
    %p43 = por %p41, %p42
    %s45 = sadd.s32 %s44, 1
    %p48 = scmp.eq.s32.totalorder %s10, 1
    %p49 = scmp.ne.s32.totalorder %s44, %s46
    %p50 = scmp.eq.s32.totalorder %s10, 0
    %p51 = por %p49, %p50
    %p52 = scmp.ne.s32.totalorder %s44, %s46
    %p53 = scmp.eq.s32.totalorder %s15, 1
    %p54 = por %p52, %p53
    %p55 = scmp.ne.s32.totalorder %s46, %s47
    %p56 = scmp.eq.s32.totalorder %s15, 0
    %p57 = por %p55, %p56
    %p58 = scmp.ne.s32.totalorder %s46, %s47
    %p59 = scmp.eq.s32.totalorder %s16, 1
    %p60 = por %p58, %p59
    %p62 = scmp.ne.s32.totalorder %s47, %s61
    %p63 = scmp.eq.s32.totalorder %s16, 0
    %p64 = por %p62, %p63
    %s66 = sadd.s32 %s65, 1
    %p69 = scmp.eq.s32.totalorder %s10, 1
    %p70 = scmp.ne.s32.totalorder %s65, %s67
    %p71 = scmp.eq.s32.totalorder %s10, 0
    %p72 = por %p70, %p71
    %p73 = scmp.ne.s32.totalorder %s65, %s67
    %p74 = scmp.eq.s32.totalorder %s15, 1
    %p75 = por %p73, %p74
    %p76 = scmp.ne.s32.totalorder %s67, %s68
    %p77 = scmp.eq.s32.totalorder %s15, 0
    %p78 = por %p76, %p77
    %p79 = scmp.ne.s32.totalorder %s67, %s68
    %p80 = scmp.eq.s32.totalorder %s16, 1
    %p81 = por %p79, %p80
    %p83 = scmp.ne.s32.totalorder %s68, %s82
    %p84 = scmp.eq.s32.totalorder %s16, 0
    %p85 = por %p83, %p84
    %s87 = sadd.s32 %s86, 1
    %p90 = scmp.eq.s32.totalorder %s10, 1
    %p91 = scmp.ne.s32.totalorder %s86, %s88
    %p92 = scmp.eq.s32.totalorder %s10, 0
    %p93 = por %p91, %p92
    %p94 = scmp.ne.s32.totalorder %s86, %s88
    %p95 = scmp.eq.s32.totalorder %s15, 1
    %p96 = por %p94, %p95
    %p97 = scmp.ne.s32.totalorder %s88, %s89
    %p98 = scmp.eq.s32.totalorder %s15, 0
    %p99 = por %p97, %p98
    %p100 = scmp.ne.s32.totalorder %s88, %s89
    %p101 = scmp.eq.s32.totalorder %s16, 1
    %p102 = por %p100, %p101
    %p104 = scmp.ne.s32.totalorder %s89, %s103
    %p105 = scmp.eq.s32.totalorder %s16, 0
    %p106 = por %p104, %p105
    %s107 = ssub.s32 %s10, %s17
    %p108 = scmp.eq.s32.totalorder %s107, 0
    %s110 = sadd.s32 %s109, 1
    %s111 = scalar_select %p108, %s109, %s110
    %p114 = pneg %p108
    %p115 = scmp.eq.s32.totalorder %s10, 1
    %p116 = por %p114, %p115
    %p117 = scmp.ne.s32.totalorder %s109, %s112
    %p118 = scmp.eq.s32.totalorder %s10, 0
    %p119 = por %p117, %p118
    %p120 = scmp.ne.s32.totalorder %s109, %s112
    %p121 = scmp.eq.s32.totalorder %s15, 1
    %p122 = por %p120, %p121
    %p123 = scmp.ne.s32.totalorder %s112, %s113
    %p124 = scmp.eq.s32.totalorder %s15, 0
    %p125 = por %p123, %p124
    %p126 = scmp.ne.s32.totalorder %s112, %s113
    %p127 = scmp.eq.s32.totalorder %s16, 1
    %p128 = por %p126, %p127
    %p130 = scmp.ne.s32.totalorder %s113, %s129
    %p131 = scmp.eq.s32.totalorder %s16, 0
    %p132 = por %p130, %p131
    %p133 = scmp.le.s32.totalorder 1, %s10
    %p134 = scmp.lt.s32.totalorder %s10, 3
    %p135 = pnand %p133, %p134
    %p136 = pneg %p135
    // Predicated region
    $region9: #{_lambda_.9} parent=5 // pred_check
      _
    $region10: #{_lambda_.9} parent=5 // pred_check_branch
      %138 = sbr.rel (%p135) target = $region12
    $region11: #{_lambda_.9} parent=5 // pred_region
      %s139 = ssub.s32 %s10, 1
      // Predicated region
      $region13: #{_lambda_.9} parent=11 // pred_check
        %p140 = pneg %p57
      $region14: #{_lambda_.9} parent=11 // pred_check_branch
        %142 = sbr.rel (%p140) target = $region16
      $region15: #{_lambda_.9} parent=11 // pred_region
        _
      $region16: #{_lambda_.9} parent=11 // pred_fallthru
        _
      // Predicated region
      $region17: #{_lambda_.9} parent=11 // pred_check
        %p143 = pneg %p78
      $region18: #{_lambda_.9} parent=11 // pred_check_branch
        %145 = sbr.rel (%p143) target = $region20
      $region19: #{_lambda_.9} parent=11 // pred_region
        _
      $region20: #{_lambda_.9} parent=11 // pred_fallthru
        _
      // Predicated region
      $region21: #{_lambda_.9} parent=11 // pred_check
        %p146 = pneg %p99
      $region22: #{_lambda_.9} parent=11 // pred_check_branch
        %148 = sbr.rel (%p146) target = $region24
      $region23: #{_lambda_.9} parent=11 // pred_region
        _
      $region24: #{_lambda_.9} parent=11 // pred_fallthru
        _
    $region12: #{_lambda_.9} parent=5 // pred_fallthru
      _
    %p149 = scmp.lt.s32.totalorder %s10, 2
    // Predicated region
    $region25: #{_lambda_.9} parent=5 // pred_check
      %p150 = pneg %p149
    $region26: #{_lambda_.9} parent=5 // pred_check_branch
      %152 = sbr.rel (%p150) target = $region28
    $region27: #{_lambda_.9} parent=5 // pred_region
      // Predicated region
      $region29: #{_lambda_.9} parent=27 // pred_check
        %p153 = pneg %p30
      $region30: #{_lambda_.9} parent=27 // pred_check_branch
        %155 = sbr.rel (%p153) target = $region32
      $region31: #{_lambda_.9} parent=27 // pred_region
        %s156 = smul.u32 2, %s10
        %p157 = scmp.lt.s32.totalorder %s156, 3
        %s158 = scalar_select %p157, %s156, 3
        %s159 = smul.addr %s158, 4
        %s160 = scalar_lea.vmem %s0, %s159
        %s161 = smul.u32 2, %s10
      $region32: #{_lambda_.9} parent=27 // pred_fallthru
        _
    $region28: #{_lambda_.9} parent=5 // pred_fallthru
      _
    %p162 = scmp.le.s32.totalorder 1, %s10
    %p163 = scmp.lt.s32.totalorder %s10, 3
    %p164 = pnand %p162, %p163
    %p165 = pneg %p164
    // Predicated region
    $region33: #{_lambda_.9} parent=5 // pred_check
      _
    $region34: #{_lambda_.9} parent=5 // pred_check_branch
      %167 = sbr.rel (%p164) target = $region36
    $region35: #{_lambda_.9} parent=5 // pred_region
      %s168 = ssub.s32 %s10, 1
      %s169 = smul.u32 2, %s15
      %p170 = scmp.lt.s32.totalorder %s169, 3
      %s171 = scalar_select %p170, %s169, 3
      %s172 = smul.addr %s171, 4
      %s173 = scalar_lea.vmem %s0, %s172
      %p174 = pneg %p36
      %p175 = pneg %p33
      %p176 = pneg %p57
      %p177 = pneg %p54
      %p178 = pneg %p78
      %p179 = pneg %p75
      %p180 = pneg %p99
      %p181 = pneg %p96
      %p182 = pneg %p125
      %p183 = pneg %p122
      %s184 = smul.u32 2, %s15
      %p185 = scmp.lt.s32.totalorder %s184, 3
      %s186 = scalar_select %p185, %s184, 3
      %s187 = smul.addr %s186, 4
      %s188 = scalar_lea.vmem %s4, %s187
      %s189 = smul.u32 2, %s15
      %p190 = scmp.lt.s32.totalorder %s189, 3
      %s191 = scalar_select %p190, %s189, 3
      %s192 = smul.addr %s191, 4
      %s193 = scalar_lea.vmem %s0, %s192
      %s194 = smul.u32 2, %s15
      %s195 = smul.u32 2, %s15
      %p196 = scmp.lt.s32.totalorder %s195, 3
      %s197 = scalar_select %p196, %s195, 3
      %s198 = smul.addr %s197, 4
      %s199 = scalar_lea.vmem %s4, %s198
      %s200 = smul.u32 2, %s15
      %v202 = vld [vmem:[%s193] sm:$0xf]
      %v203 = vld [vmem:[%s193 + $0x4] sm:$0xf]
      %v204 = vunpack.c.l.bf16 %v202
      %v205 = vunpack.c.l.bf16 %v203
      %v206 = vld [vmem:[%s1] sm:$0x1]
      %v207 = vmul.f32 %v204, %v204
      %v208 = vmul.f32 %v205, %v205
      %vm209 = vcmask 261120
      %v210 = vsel %vm209, %v207, 0.0
      %211 = vadd.xlane.f32.xlu0 %v210
      %v212 = vpop.xlane.xlu0 %211
      %v213 = vsel %vm209, %v208, 0.0
      %214 = vadd.xlane.f32.xlu0 %v213
      %v215 = vpop.xlane.xlu0 %214
      %v216 = vrcp.pop 32.0
      %v217 = vmul.f32 %v212, %v216
      %v218 = vmul.f32 %v215, %v216
      %v219 = vadd.f32 %v217, 1e-06
      %v220 = vadd.f32 %v218, 1e-06
      %v221 = vrsqrt.pop %v219
      %v222 = vrsqrt.pop %v220
      %v223 = vmul.f32 %v204, %v221
      %v224 = vmul.f32 %v205, %v222
      %v226 = vlaneseq
      %v227 = vshrl.u32 %v226, 7
      %v228 = vsub.s32 0, %v227
      %v229 = vrot.slane %v206, %v228
      %v231 = vmul.f32 %v223, %v229
      %v232 = vmul.f32 %v224, %v229
      %v233 = vpack.c.bf16 %v232, %v231
      %v234 = vld [vmem:[%s2] sm:$0xf]
      %v235 = vld [vmem:[%s2 + $0x4] sm:$0xf]
      %v236 = vld [vmem:[%s2 + $0x8] sm:$0xf]
      %v237 = vld [vmem:[%s2 + $0xc] sm:$0xf]
      %v242 = vunpack.c.l.b16 %v234
      %v243 = vunpack.c.l.b16 %v235
      %v244 = vunpack.c.l.b16 %v236
      %v245 = vunpack.c.l.b16 %v237
      %v246 = vpack.c.b16 %v243, %v242
      %v247 = vpack.c.b16 %v245, %v244
      %v251 = vsel %vm209, %v233, 0
      %253 = vmatprep.subr.bf16.mxu0 0
      %254 = vmatpush1.bf16.msra.mxu0 %v246
      %255 = vmatprep.subr.bf16.mxu0 0
      %256 = vmatpush1.bf16.msra.mxu0 %v247
      %257 = vmatprep.subr.bf16.mxu0 0
      %258 = vmatpush1.bf16.msra.mxu0 0
      %259 = vmatprep.subr.bf16.mxu0 0
      %260 = vmatpush1.bf16.msra.mxu0 0
      %261 = vmatprep.subr.bf16.mxu0 0
      %262 = vmatpush1.bf16.msra.mxu0 0
      %263 = vmatprep.subr.bf16.mxu0 0
      %264 = vmatpush1.bf16.msra.mxu0 0
      %265 = vmatprep.subr.bf16.mxu0 0
      %266 = vmatpush1.bf16.msra.mxu0 0
      %267 = vmatprep.subr.bf16.mxu0 0
      %268 = vmatpush1.bf16.msra.mxu0 0
      %269 = vmatprep.subr.bf16.mxu0 0
      %270 = vmatpush1.bf16.msra.mxu0 0
      %271 = vmatprep.subr.bf16.mxu0 0
      %272 = vmatpush1.bf16.msra.mxu0 0
      %273 = vmatprep.subr.bf16.mxu0 0
      %274 = vmatpush1.bf16.msra.mxu0 0
      %275 = vmatprep.subr.bf16.mxu0 0
      %276 = vmatpush1.bf16.msra.mxu0 0
      %277 = vmatprep.subr.bf16.mxu0 0
      %278 = vmatpush1.bf16.msra.mxu0 0
      %279 = vmatprep.subr.bf16.mxu0 0
      %280 = vmatpush1.bf16.msra.mxu0 0
      %281 = vmatprep.subr.bf16.mxu0 0
      %282 = vmatpush1.bf16.msra.mxu0 0
      %283 = vmatprep.subr.bf16.mxu0 0
      %284 = vmatpush1.bf16.msra.mxu0 0
      %285 = vmatprep.mubr.bf16.mxu0 0
      %286 = vmatmul.mubr.bf16.gmra.mrb[0].mxu0 %v251
      %v287 = vpop.f32.mrb[0].mxu0
      %v288 = vadd.f32 0.0, %v287
      %v289 = vpop.f32.mrb[0].mxu0
      %v290 = vpop.f32.mrb[0].mxu0
      %v291 = vadd.f32 0.0, %v290
      %v292 = vpop.f32.mrb[0].mxu0
      %293 = vdwg.mxu0
      %v294 = vmax.f32 %v288, 0.0
      %v295 = vmax.f32 %v291, 0.0
      %v296 = vpack.c.bf16 %v295, %v294
      %v297 = vld [vmem:[%s3] sm:$0xf]
      %v298 = vld [vmem:[%s3 + $0x4] sm:$0xf]
      %v299 = vld [vmem:[%s3 + $0x8] sm:$0xf]
      %v300 = vld [vmem:[%s3 + $0xc] sm:$0xf]
      %v301 = vld [vmem:[%s3 + $0x10] sm:$0xf]
      %v302 = vld [vmem:[%s3 + $0x14] sm:$0xf]
      %v303 = vld [vmem:[%s3 + $0x18] sm:$0xf]
      %v304 = vld [vmem:[%s3 + $0x1c] sm:$0xf]
      %v313 = vunpack.c.l.b16 %v297
      %v314 = vunpack.c.l.b16 %v298
      %v315 = vunpack.c.l.b16 %v299
      %v316 = vunpack.c.l.b16 %v300
      %v317 = vunpack.c.l.b16 %v301
      %v318 = vunpack.c.l.b16 %v302
      %v319 = vunpack.c.l.b16 %v303
      %v320 = vunpack.c.l.b16 %v304
      %v321 = vpack.c.b16 %v314, %v313
      %v322 = vpack.c.b16 %v316, %v315
      %v323 = vpack.c.b16 %v318, %v317
      %v324 = vpack.c.b16 %v320, %v319
      %vm329 = vcmask 523264
      %v331 = vsel %vm329, %v296, 0
      %333 = vmatprep.subr.bf16.mxu0 0
      %334 = vmatpush1.bf16.msra.mxu0 %v321
      %335 = vmatprep.subr.bf16.mxu0 0
      %336 = vmatpush1.bf16.msra.mxu0 %v322
      %337 = vmatprep.subr.bf16.mxu0 0
      %338 = vmatpush1.bf16.msra.mxu0 %v323
      %339 = vmatprep.subr.bf16.mxu0 0
      %340 = vmatpush1.bf16.msra.mxu0 %v324
      %341 = vmatprep.subr.bf16.mxu0 0
      %342 = vmatpush1.bf16.msra.mxu0 0
      %343 = vmatprep.subr.bf16.mxu0 0
      %344 = vmatpush1.bf16.msra.mxu0 0
      %345 = vmatprep.subr.bf16.mxu0 0
      %346 = vmatpush1.bf16.msra.mxu0 0
      %347 = vmatprep.subr.bf16.mxu0 0
      %348 = vmatpush1.bf16.msra.mxu0 0
      %349 = vmatprep.subr.bf16.mxu0 0
      %350 = vmatpush1.bf16.msra.mxu0 0
      %351 = vmatprep.subr.bf16.mxu0 0
      %352 = vmatpush1.bf16.msra.mxu0 0
      %353 = vmatprep.subr.bf16.mxu0 0
      %354 = vmatpush1.bf16.msra.mxu0 0
      %355 = vmatprep.subr.bf16.mxu0 0
      %356 = vmatpush1.bf16.msra.mxu0 0
      %357 = vmatprep.subr.bf16.mxu0 0
      %358 = vmatpush1.bf16.msra.mxu0 0
      %359 = vmatprep.subr.bf16.mxu0 0
      %360 = vmatpush1.bf16.msra.mxu0 0
      %361 = vmatprep.subr.bf16.mxu0 0
      %362 = vmatpush1.bf16.msra.mxu0 0
      %363 = vmatprep.subr.bf16.mxu0 0
      %364 = vmatpush1.bf16.msra.mxu0 0
      %365 = vmatprep.mubr.bf16.mxu0 0
      %366 = vmatmul.mubr.bf16.gmra.mrb[0].mxu0 %v331
      %v367 = vpop.f32.mrb[0].mxu0
      %v368 = vadd.f32 0.0, %v367
      %v369 = vpop.f32.mrb[0].mxu0
      %v370 = vpop.f32.mrb[0].mxu0
      %v371 = vadd.f32 0.0, %v370
      %v372 = vpop.f32.mrb[0].mxu0
      %373 = vdwg.mxu0
      %v374 = vadd.f32 %v204, %v368
      %v375 = vadd.f32 %v205, %v371
      %v376 = vpack.c.bf16 %v375, %v374
      %v378 = vunpack.c.l.b16 %v376
      %v379 = vunpack.c.h.b16 %v376
      %v380 = vpack.c.b16 %v378, %v378
      %v381 = vpack.c.b16 %v379, %v379
      %vm384 = vcmask 257024
      %385 = vst.msk [vmem:[%s199] sm:$0xf] %vm384, %v380
      %386 = vst.msk [vmem:[%s199 + $0x4] sm:$0xf] %vm384, %v381
      %s387 = smul.u32 2, %s15
      %p388 = scmp.lt.s32.totalorder %s387, 3
      %s389 = scalar_select %p388, %s387, 3
      %s390 = smul.addr %s389, 4
      %s391 = scalar_lea.vmem %s4, %s390
      // Predicated region
      $region37: #{_lambda_.9} parent=35 // pred_check
        %p392 = pneg %p122
      $region38: #{_lambda_.9} parent=35 // pred_check_branch
        %394 = sbr.rel (%p392) target = $region40
      $region39: #{_lambda_.9} parent=35 // pred_region
        %s395 = smul.u32 2, %s15
      $region40: #{_lambda_.9} parent=35 // pred_fallthru
        _
    $region36: #{_lambda_.9} parent=5 // pred_fallthru
      _
    %p396 = scmp.le.s32.totalorder 2, %s10
    // Predicated region
    $region41: #{_lambda_.9} parent=5 // pred_check
      %p397 = pneg %p396
    $region42: #{_lambda_.9} parent=5 // pred_check_branch
      %399 = sbr.rel (%p397) target = $region44
    $region43: #{_lambda_.9} parent=5 // pred_region
      %s400 = ssub.s32 %s10, 2
      // Predicated region
      $region45: #{_lambda_.9} parent=43 // pred_check
        %p401 = pneg %p128
      $region46: #{_lambda_.9} parent=43 // pred_check_branch
        %403 = sbr.rel (%p401) target = $region48
      $region47: #{_lambda_.9} parent=43 // pred_region
        %s404 = smul.u32 2, %s16
        %p405 = scmp.lt.s32.totalorder %s404, 3
        %s406 = scalar_select %p405, %s404, 3
        %s407 = smul.addr %s406, 4
        %s408 = scalar_lea.vmem %s4, %s407
      $region48: #{_lambda_.9} parent=43 // pred_fallthru
        _
    $region44: #{_lambda_.9} parent=5 // pred_fallthru
      _
  $region6: #{_lambda_.9} parent=0 // loop_footer
    %s14 = sadd.s32 1, %s10
  $region7: #{_lambda_.9} parent=0 // loop_footer_branch
    %9 = sbr.rel target = $region3
  $region8: #{_lambda_.9} parent=0 // loop_exit
    _

// kernel: _lambda_.8
$region0: #{_lambda_.8}
  #allocation0 [shape = 'u32[]', space=smem, size = 0x4, offset = 0x4, fixed_abs, tag = 'smem constant byte address 0x4 - core index']
  #allocation1 [shape = 'u32[144,128]{1,0:T(1,128)}', space=vmem, size = 0x12000, scoped, tag = 'internal scratch']
  #allocation2 [shape = 'bf16[16,32]{1,0:T(16,128)(2,1)}', space=vmem, size = 0x1000, scoped, tag = 'scratch operand']
  %s0 = inlined_call_operand.vmem [shape: bf16[2,16,96], index: 0, kind: input, shape index: {}]
  %s1 = inlined_call_operand.vmem [shape: bf16[1,4,16,16], index: 1, kind: input, shape index: {}]
  %s2 = inlined_call_operand.vmem [shape: f32[2,1,1,16], index: 2, kind: input, shape index: {}]
  %s3 = inlined_call_operand.vmem [shape: bf16[32,32], index: 3, kind: input, shape index: {}]
  %s4 = inlined_call_operand.vmem [shape: bf16[2,16,32], index: 4, kind: input, shape index: {}, may-alias: {4,5}]
  %s5 = inlined_call_operand.vmem [shape: bf16[2,16,32], index: 5, kind: output, shape index: {}, may-alias: {4,5}]
  %s6 = sld [smem:[#allocation0]]
  $region53: #{_lambda_.8} parent=0
    _
  %s8 = ssub.s32 1, %s6
  %s9 = scalar_select 0, %s8, %s6
  loop: start=0, step=1, limit=4
  $region2: #{_lambda_.8} parent=0 // loop_pre_header
    _
  $region3: #{_lambda_.8} parent=0 // loop_header
    %s11 = sphi 0, %s15
    %p12 = scmp.ge.s32.totalorder %s11, 4
    %s21 = sphi 0, %s23
    %s24 = sphi 0, %s21
    %s25 = sphi 0, %s24
    %s41 = sphi 0, %s25
    %s45 = sphi 0, %s45
    %s47 = sphi 0, %s45
    %s48 = sphi 0, %s47
    %s62 = sphi 0, %s48
    %s68 = sphi 0, %s70
    %s71 = sphi 0, %s68
    %s72 = sphi 0, %s71
    %s88 = sphi 0, %s72
    %s92 = sphi 0, %s92
    %s94 = sphi 0, %s92
    %s95 = sphi 0, %s94
    %s109 = sphi 0, %s95
    %s115 = sphi 0, %s117
    %s118 = sphi 0, %s115
    %s119 = sphi 0, %s118
    %s135 = sphi 0, %s119
    %s141 = sphi 0, %s143
    %s144 = sphi 0, %s141
    %s145 = sphi 0, %s144
    %s161 = sphi 0, %s145
  $region4: #{_lambda_.8} parent=0 // loop_header_branch
    %14 = sbr.rel (%p12) target = $region8
  $region5: #{_lambda_.8} parent=0 // loop_body
    %s16 = ssub.s32 %s11, 1
    %s17 = ssub.s32 %s11, 2
    %s18 = sadd.s32 %s11, 1
    %s19 = ssub.s32 %s11, %s18
    %p20 = scmp.eq.s32.totalorder %s19, 0
    %s22 = sadd.s32 %s21, 1
    %s23 = scalar_select %p20, %s21, %s22
    %p26 = pneg %p20
    %p27 = scmp.eq.s32.totalorder %s11, 1
    %p28 = por %p26, %p27
    %p29 = scmp.ne.s32.totalorder %s21, %s24
    %p30 = scmp.eq.s32.totalorder %s11, 0
    %p31 = por %p29, %p30
    %p32 = scmp.ne.s32.totalorder %s21, %s24
    %p33 = scmp.eq.s32.totalorder %s16, 1
    %p34 = por %p32, %p33
    %p35 = scmp.ne.s32.totalorder %s24, %s25
    %p36 = scmp.eq.s32.totalorder %s16, 0
    %p37 = por %p35, %p36
    %p38 = scmp.ne.s32.totalorder %s24, %s25
    %p39 = scmp.eq.s32.totalorder %s17, 1
    %p40 = por %p38, %p39
    %p42 = scmp.ne.s32.totalorder %s25, %s41
    %p43 = scmp.eq.s32.totalorder %s17, 0
    %p44 = por %p42, %p43
    %s46 = sadd.s32 %s45, 1
    %p49 = scmp.eq.s32.totalorder %s11, 1
    %p50 = scmp.ne.s32.totalorder %s45, %s47
    %p51 = scmp.eq.s32.totalorder %s11, 0
    %p52 = por %p50, %p51
    %p53 = scmp.ne.s32.totalorder %s45, %s47
    %p54 = scmp.eq.s32.totalorder %s16, 1
    %p55 = por %p53, %p54
    %p56 = scmp.ne.s32.totalorder %s47, %s48
    %p57 = scmp.eq.s32.totalorder %s16, 0
    %p58 = por %p56, %p57
    %p59 = scmp.ne.s32.totalorder %s47, %s48
    %p60 = scmp.eq.s32.totalorder %s17, 1
    %p61 = por %p59, %p60
    %p63 = scmp.ne.s32.totalorder %s48, %s62
    %p64 = scmp.eq.s32.totalorder %s17, 0
    %p65 = por %p63, %p64
    %s66 = ssub.s32 %s11, %s18
    %p67 = scmp.eq.s32.totalorder %s66, 0
    %s69 = sadd.s32 %s68, 1
    %s70 = scalar_select %p67, %s68, %s69
    %p73 = pneg %p67
    %p74 = scmp.eq.s32.totalorder %s11, 1
    %p75 = por %p73, %p74
    %p76 = scmp.ne.s32.totalorder %s68, %s71
    %p77 = scmp.eq.s32.totalorder %s11, 0
    %p78 = por %p76, %p77
    %p79 = scmp.ne.s32.totalorder %s68, %s71
    %p80 = scmp.eq.s32.totalorder %s16, 1
    %p81 = por %p79, %p80
    %p82 = scmp.ne.s32.totalorder %s71, %s72
    %p83 = scmp.eq.s32.totalorder %s16, 0
    %p84 = por %p82, %p83
    %p85 = scmp.ne.s32.totalorder %s71, %s72
    %p86 = scmp.eq.s32.totalorder %s17, 1
    %p87 = por %p85, %p86
    %p89 = scmp.ne.s32.totalorder %s72, %s88
    %p90 = scmp.eq.s32.totalorder %s17, 0
    %p91 = por %p89, %p90
    %s93 = sadd.s32 %s92, 1
    %p96 = scmp.eq.s32.totalorder %s11, 1
    %p97 = scmp.ne.s32.totalorder %s92, %s94
    %p98 = scmp.eq.s32.totalorder %s11, 0
    %p99 = por %p97, %p98
    %p100 = scmp.ne.s32.totalorder %s92, %s94
    %p101 = scmp.eq.s32.totalorder %s16, 1
    %p102 = por %p100, %p101
    %p103 = scmp.ne.s32.totalorder %s94, %s95
    %p104 = scmp.eq.s32.totalorder %s16, 0
    %p105 = por %p103, %p104
    %p106 = scmp.ne.s32.totalorder %s94, %s95
    %p107 = scmp.eq.s32.totalorder %s17, 1
    %p108 = por %p106, %p107
    %p110 = scmp.ne.s32.totalorder %s95, %s109
    %p111 = scmp.eq.s32.totalorder %s17, 0
    %p112 = por %p110, %p111
    %s113 = ssub.s32 %s11, %s18
    %p114 = scmp.eq.s32.totalorder %s113, 0
    %s116 = sadd.s32 %s115, 1
    %s117 = scalar_select %p114, %s115, %s116
    %p120 = pneg %p114
    %p121 = scmp.eq.s32.totalorder %s11, 1
    %p122 = por %p120, %p121
    %p123 = scmp.ne.s32.totalorder %s115, %s118
    %p124 = scmp.eq.s32.totalorder %s11, 0
    %p125 = por %p123, %p124
    %p126 = scmp.ne.s32.totalorder %s115, %s118
    %p127 = scmp.eq.s32.totalorder %s16, 1
    %p128 = por %p126, %p127
    %p129 = scmp.ne.s32.totalorder %s118, %s119
    %p130 = scmp.eq.s32.totalorder %s16, 0
    %p131 = por %p129, %p130
    %p132 = scmp.ne.s32.totalorder %s118, %s119
    %p133 = scmp.eq.s32.totalorder %s17, 1
    %p134 = por %p132, %p133
    %p136 = scmp.ne.s32.totalorder %s119, %s135
    %p137 = scmp.eq.s32.totalorder %s17, 0
    %p138 = por %p136, %p137
    %s139 = ssub.s32 %s11, %s18
    %p140 = scmp.eq.s32.totalorder %s139, 0
    %s142 = sadd.s32 %s141, 1
    %s143 = scalar_select %p140, %s141, %s142
    %p146 = pneg %p140
    %p147 = scmp.eq.s32.totalorder %s11, 1
    %p148 = por %p146, %p147
    %p149 = scmp.ne.s32.totalorder %s141, %s144
    %p150 = scmp.eq.s32.totalorder %s11, 0
    %p151 = por %p149, %p150
    %p152 = scmp.ne.s32.totalorder %s141, %s144
    %p153 = scmp.eq.s32.totalorder %s16, 1
    %p154 = por %p152, %p153
    %p155 = scmp.ne.s32.totalorder %s144, %s145
    %p156 = scmp.eq.s32.totalorder %s16, 0
    %p157 = por %p155, %p156
    %p158 = scmp.ne.s32.totalorder %s144, %s145
    %p159 = scmp.eq.s32.totalorder %s17, 1
    %p160 = por %p158, %p159
    %p162 = scmp.ne.s32.totalorder %s145, %s161
    %p163 = scmp.eq.s32.totalorder %s17, 0
    %p164 = por %p162, %p163
    %p165 = scmp.le.s32.totalorder 1, %s11
    %p166 = scmp.lt.s32.totalorder %s11, 3
    %p167 = pnand %p165, %p166
    %p168 = pneg %p167
    // Predicated region
    $region9: #{_lambda_.8} parent=5 // pred_check
      _
    $region10: #{_lambda_.8} parent=5 // pred_check_branch
      %170 = sbr.rel (%p167) target = $region12
    $region11: #{_lambda_.8} parent=5 // pred_region
      %s171 = ssub.s32 %s11, 1
      // Predicated region
      $region13: #{_lambda_.8} parent=11 // pred_check
        %p172 = pneg %p58
      $region14: #{_lambda_.8} parent=11 // pred_check_branch
        %174 = sbr.rel (%p172) target = $region16
      $region15: #{_lambda_.8} parent=11 // pred_region
        _
      $region16: #{_lambda_.8} parent=11 // pred_fallthru
        _
      // Predicated region
      $region17: #{_lambda_.8} parent=11 // pred_check
        %p175 = pneg %p105
      $region18: #{_lambda_.8} parent=11 // pred_check_branch
        %177 = sbr.rel (%p175) target = $region20
      $region19: #{_lambda_.8} parent=11 // pred_region
        _
      $region20: #{_lambda_.8} parent=11 // pred_fallthru
        _
    $region12: #{_lambda_.8} parent=5 // pred_fallthru
      _
    %p178 = scmp.lt.s32.totalorder %s11, 2
    // Predicated region
    $region21: #{_lambda_.8} parent=5 // pred_check
      %p179 = pneg %p178
    $region22: #{_lambda_.8} parent=5 // pred_check_branch
      %181 = sbr.rel (%p179) target = $region24
    $region23: #{_lambda_.8} parent=5 // pred_region
      // Predicated region
      $region25: #{_lambda_.8} parent=23 // pred_check
        %p182 = pneg %p31
      $region26: #{_lambda_.8} parent=23 // pred_check_branch
        %184 = sbr.rel (%p182) target = $region28
      $region27: #{_lambda_.8} parent=23 // pred_region
        %p185 = scmp.lt.s32.totalorder %s11, 1
        %s186 = scalar_select %p185, %s11, 1
        %s187 = smul.addr %s186, 2
        %s188 = smul.addr %s187, 4
        %s189 = scalar_lea.vmem %s0, %s188
      $region28: #{_lambda_.8} parent=23 // pred_fallthru
        _
      // Predicated region
      $region29: #{_lambda_.8} parent=23 // pred_check
        %p190 = pneg %p78
      $region30: #{_lambda_.8} parent=23 // pred_check_branch
        %192 = sbr.rel (%p190) target = $region32
      $region31: #{_lambda_.8} parent=23 // pred_region
        %p193 = scmp.lt.s32.totalorder %s11, 1
        %s194 = scalar_select %p193, %s11, 1
        %s195 = scalar_lea.vmem %s2, %s194
      $region32: #{_lambda_.8} parent=23 // pred_fallthru
        _
      // Predicated region
      $region33: #{_lambda_.8} parent=23 // pred_check
        %p196 = pneg %p125
      $region34: #{_lambda_.8} parent=23 // pred_check_branch
        %198 = sbr.rel (%p196) target = $region36
      $region35: #{_lambda_.8} parent=23 // pred_region
        %p199 = scmp.lt.s32.totalorder %s11, 1
        %s200 = scalar_select %p199, %s11, 1
        %s201 = smul.addr %s200, 2
        %s202 = smul.addr %s201, 4
        %s203 = scalar_lea.vmem %s4, %s202
      $region36: #{_lambda_.8} parent=23 // pred_fallthru
        _
    $region24: #{_lambda_.8} parent=5 // pred_fallthru
      _
    %p204 = scmp.le.s32.totalorder 1, %s11
    %p205 = scmp.lt.s32.totalorder %s11, 3
    %p206 = pnand %p204, %p205
    %p207 = pneg %p206
    // Predicated region
    $region37: #{_lambda_.8} parent=5 // pred_check
      _
    $region38: #{_lambda_.8} parent=5 // pred_check_branch
      %209 = sbr.rel (%p206) target = $region40
    $region39: #{_lambda_.8} parent=5 // pred_region
      %s210 = ssub.s32 %s11, 1
      %p211 = scmp.lt.s32.totalorder %s16, 1
      %s212 = scalar_select %p211, %s16, 1
      %s213 = smul.addr %s212, 2
      %s214 = smul.addr %s213, 4
      %s215 = scalar_lea.vmem %s0, %s214
      %p216 = pneg %p37
      %p217 = pneg %p34
      %p218 = pneg %p58
      %p219 = pneg %p55
      %p220 = scmp.lt.s32.totalorder %s16, 1
      %s221 = scalar_select %p220, %s16, 1
      %s222 = scalar_lea.vmem %s2, %s221
      %p223 = pneg %p84
      %p224 = pneg %p81
      %p225 = pneg %p105
      %p226 = pneg %p102
      %p227 = scmp.lt.s32.totalorder %s16, 1
      %s228 = scalar_select %p227, %s16, 1
      %s229 = smul.addr %s228, 2
      %s230 = smul.addr %s229, 4
      %s231 = scalar_lea.vmem %s4, %s230
      %p232 = pneg %p131
      %p233 = pneg %p128
      %p234 = pneg %p157
      %p235 = pneg %p154
      %p236 = scmp.lt.s32.totalorder %s16, 1
      %s237 = scalar_select %p236, %s16, 1
      %s238 = smul.addr %s237, 2
      %s239 = smul.addr %s238, 4
      %s240 = scalar_lea.vmem %s5, %s239
      %p241 = scmp.lt.s32.totalorder %s16, 1
      %s242 = scalar_select %p241, %s16, 1
      %s243 = smul.addr %s242, 2
      %s244 = smul.addr %s243, 4
      %s245 = scalar_lea.vmem %s0, %s244
      %p246 = scmp.lt.s32.totalorder %s16, 1
      %s247 = scalar_select %p246, %s16, 1
      %s248 = scalar_lea.vmem %s2, %s247
      %p249 = scmp.lt.s32.totalorder %s16, 1
      %s250 = scalar_select %p249, %s16, 1
      %s251 = smul.addr %s250, 2
      %s252 = smul.addr %s251, 4
      %s253 = scalar_lea.vmem %s4, %s252
      %p254 = scmp.lt.s32.totalorder %s16, 1
      %s255 = scalar_select %p254, %s16, 1
      %s256 = smul.addr %s255, 2
      %s257 = smul.addr %s256, 4
      %s258 = scalar_lea.vmem %s5, %s257
      %v260 = vld [vmem:[%s248] sm:$0x1]
      %v261 = vld [vmem:[%s245] sm:$0xf]
      %v262 = vld [vmem:[%s245 + $0x4] sm:$0xf]
      %v263 = vld [vmem:[%s1] sm:$0xf]
      %v264 = vld [vmem:[%s1 + $0x4] sm:$0xf]
      %v265 = vunpack.c.l.bf16 %v263
      %v266 = vunpack.c.l.bf16 %v264
      %v269 = vunpack.c.l.b16 %v261
      %v270 = vunpack.c.l.b16 %v262
      %v271 = vpack.c.b16 %v270, %v269
      %272 = vrot.lane.b32.xlu0 %v271, 96
      %v273 = vpop.permute.xlu0 %272
      %vm274 = vcmask 64512
      %v276 = vsel %vm274, %v271, 0
      %v279 = vsel %vm274, %v273, 0
      %281 = vmatprep.subr.bf16.mxu0 0
      %282 = vmatpush1.bf16.xpose.msra.mxu0 %v279
      %283 = vmatprep.subr.bf16.mxu0 0
      %284 = vmatpush1.bf16.xpose.msra.mxu0 0
      %285 = vmatprep.subr.bf16.mxu0 0
      %286 = vmatpush1.bf16.xpose.msra.mxu0 0
      %287 = vmatprep.subr.bf16.mxu0 0
      %288 = vmatpush1.bf16.xpose.msra.mxu0 0
      %289 = vmatprep.subr.bf16.mxu0 0
      %290 = vmatpush1.bf16.xpose.msra.mxu0 0
      %291 = vmatprep.subr.bf16.mxu0 0
      %292 = vmatpush1.bf16.xpose.msra.mxu0 0
      %293 = vmatprep.subr.bf16.mxu0 0
      %294 = vmatpush1.bf16.xpose.msra.mxu0 0
      %295 = vmatprep.subr.bf16.mxu0 0
      %296 = vmatpush1.bf16.xpose.msra.mxu0 0
      %297 = vmatprep.subr.bf16.mxu0 0
      %298 = vmatpush1.bf16.xpose.msra.mxu0 0
      %299 = vmatprep.subr.bf16.mxu0 0
      %300 = vmatpush1.bf16.xpose.msra.mxu0 0
      %301 = vmatprep.subr.bf16.mxu0 0
      %302 = vmatpush1.bf16.xpose.msra.mxu0 0
      %303 = vmatprep.subr.bf16.mxu0 0
      %304 = vmatpush1.bf16.xpose.msra.mxu0 0
      %305 = vmatprep.subr.bf16.mxu0 0
      %306 = vmatpush1.bf16.xpose.msra.mxu0 0
      %307 = vmatprep.subr.bf16.mxu0 0
      %308 = vmatpush1.bf16.xpose.msra.mxu0 0
      %309 = vmatprep.subr.bf16.mxu0 0
      %310 = vmatpush1.bf16.xpose.msra.mxu0 0
      %311 = vmatprep.subr.bf16.mxu0 0
      %312 = vmatpush1.bf16.xpose.msra.mxu0 0
      %313 = vmatprep.mubr.bf16.mxu0 0
      %314 = vmatmul.mubr.bf16.gmra.mrb[0].mxu0 %v276
      %v315 = vpop.f32.mrb[0].mxu0
      %v316 = vadd.f32 %v265, %v315
      %v317 = vpop.f32.mrb[0].mxu0
      %v318 = vpop.f32.mrb[0].mxu0
      %v319 = vadd.f32 %v266, %v318
      %v320 = vpop.f32.mrb[0].mxu0
      %321 = vdwg.mxu0
      %v323 = vlaneseq
      %v324 = vshrl.u32 %v323, 7
      %v325 = vsub.s32 0, %v324
      %v326 = vrot.slane %v260, %v325
      %v328 = vadd.f32 %v316, %v326
      %v329 = vadd.f32 %v319, %v326
      %vm330 = vcmask 130048
      %v331 = vsel %vm330, %v328, -inf
      %332 = vmax.xlane.f32.xlu0 %v331
      %v333 = vpop.xlane.xlu0 %332
      %v334 = vsel %vm330, %v329, -inf
      %335 = vmax.xlane.f32.xlu0 %v334
      %v336 = vpop.xlane.xlu0 %335
      %v337 = vsub.f32 %v328, %v333
      %v338 = vsub.f32 %v329, %v336
      %v339 = vmul.f32 %v337, 1.442695
      %v340 = vpow.pop %v339
      %v341 = vmul.f32 %v338, 1.442695
      %v342 = vpow.pop %v341
      %v343 = vsel %vm330, %v340, 0.0
      %344 = vadd.xlane.f32.xlu0 %v343
      %v345 = vpop.xlane.xlu0 %344
      %v346 = vsel %vm330, %v342, 0.0
      %347 = vadd.xlane.f32.xlu0 %v346
      %v348 = vpop.xlane.xlu0 %347
      %v349 = vrcp.pop %v345
      %v350 = vrcp.pop %v348
      %v351 = vmul.f32 %v340, %v349
      %v352 = vmul.f32 %v342, %v350
      %v353 = vpack.c.bf16 %v352, %v351
      %354 = vrot.lane.b32.xlu0 %v271, 64
      %v355 = vpop.permute.xlu0 %354
      %v358 = vsel %vm330, %v353, 0
      %360 = vmatprep.subr.bf16.mxu0 0
      %361 = vmatpush1.bf16.msra.mxu0 %v355
      %362 = vmatprep.subr.bf16.mxu0 0
      %363 = vmatpush1.bf16.msra.mxu0 0
      %364 = vmatprep.subr.bf16.mxu0 0
      %365 = vmatpush1.bf16.msra.mxu0 0
      %366 = vmatprep.subr.bf16.mxu0 0
      %367 = vmatpush1.bf16.msra.mxu0 0
      %368 = vmatprep.subr.bf16.mxu0 0
      %369 = vmatpush1.bf16.msra.mxu0 0
      %370 = vmatprep.subr.bf16.mxu0 0
      %371 = vmatpush1.bf16.msra.mxu0 0
      %372 = vmatprep.subr.bf16.mxu0 0
      %373 = vmatpush1.bf16.msra.mxu0 0
      %374 = vmatprep.subr.bf16.mxu0 0
      %375 = vmatpush1.bf16.msra.mxu0 0
      %376 = vmatprep.subr.bf16.mxu0 0
      %377 = vmatpush1.bf16.msra.mxu0 0
      %378 = vmatprep.subr.bf16.mxu0 0
      %379 = vmatpush1.bf16.msra.mxu0 0
      %380 = vmatprep.subr.bf16.mxu0 0
      %381 = vmatpush1.bf16.msra.mxu0 0
      %382 = vmatprep.subr.bf16.mxu0 0
      %383 = vmatpush1.bf16.msra.mxu0 0
      %384 = vmatprep.subr.bf16.mxu0 0
      %385 = vmatpush1.bf16.msra.mxu0 0
      %386 = vmatprep.subr.bf16.mxu0 0
      %387 = vmatpush1.bf16.msra.mxu0 0
      %388 = vmatprep.subr.bf16.mxu0 0
      %389 = vmatpush1.bf16.msra.mxu0 0
      %390 = vmatprep.subr.bf16.mxu0 0
      %391 = vmatpush1.bf16.msra.mxu0 0
      %392 = vmatprep.mubr.bf16.mxu0 0
      %393 = vmatmul.mubr.bf16.gmra.mrb[0].mxu0 %v358
      %v394 = vpop.f32.mrb[0].mxu0
      %v395 = vadd.f32 0.0, %v394
      %v396 = vpop.f32.mrb[0].mxu0
      %v397 = vpop.f32.mrb[0].mxu0
      %v398 = vadd.f32 0.0, %v397
      %v399 = vpop.f32.mrb[0].mxu0
      %400 = vdwg.mxu0
      %v401 = vpack.c.bf16 %v398, %v395
      %402 = vst.msk [vmem:[#allocation2] sm:$0xff] %vm274, %v401
      %v403 = vld [vmem:[%s245] sm:$0xf]
      %v404 = vld [vmem:[%s245 + $0x4] sm:$0xf]
      %s405 = scalar_lea.vmem %s1, 8
      %v406 = vld [vmem:[%s405] sm:$0xf]
      %v407 = vld [vmem:[%s405 + $0x4] sm:$0xf]
      %v408 = vunpack.c.l.bf16 %v406
      %v409 = vunpack.c.l.bf16 %v407
      %v412 = vunpack.c.l.b16 %v403
      %v413 = vunpack.c.l.b16 %v404
      %v414 = vpack.c.b16 %v413, %v412
      %415 = vrot.lane.b32.xlu0 %v414, 120
      %v416 = vpop.permute.xlu0 %415
      %417 = vrot.lane.b32.xlu0 %v414, 88
      %v418 = vpop.permute.xlu0 %417
      %v420 = vsel %vm274, %v416, 0
      %v423 = vsel %vm274, %v418, 0
      %425 = vmatprep.subr.bf16.mxu0 0
      %426 = vmatpush1.bf16.xpose.msra.mxu0 %v423
      %427 = vmatprep.subr.bf16.mxu0 0
      %428 = vmatpush1.bf16.xpose.msra.mxu0 0
      %429 = vmatprep.subr.bf16.mxu0 0
      %430 = vmatpush1.bf16.xpose.msra.mxu0 0
      %431 = vmatprep.subr.bf16.mxu0 0
      %432 = vmatpush1.bf16.xpose.msra.mxu0 0
      %433 = vmatprep.subr.bf16.mxu0 0
      %434 = vmatpush1.bf16.xpose.msra.mxu0 0
      %435 = vmatprep.subr.bf16.mxu0 0
      %436 = vmatpush1.bf16.xpose.msra.mxu0 0
      %437 = vmatprep.subr.bf16.mxu0 0
      %438 = vmatpush1.bf16.xpose.msra.mxu0 0
      %439 = vmatprep.subr.bf16.mxu0 0
      %440 = vmatpush1.bf16.xpose.msra.mxu0 0
      %441 = vmatprep.subr.bf16.mxu0 0
      %442 = vmatpush1.bf16.xpose.msra.mxu0 0
      %443 = vmatprep.subr.bf16.mxu0 0
      %444 = vmatpush1.bf16.xpose.msra.mxu0 0
      %445 = vmatprep.subr.bf16.mxu0 0
      %446 = vmatpush1.bf16.xpose.msra.mxu0 0
      %447 = vmatprep.subr.bf16.mxu0 0
      %448 = vmatpush1.bf16.xpose.msra.mxu0 0
      %449 = vmatprep.subr.bf16.mxu0 0
      %450 = vmatpush1.bf16.xpose.msra.mxu0 0
      %451 = vmatprep.subr.bf16.mxu0 0
      %452 = vmatpush1.bf16.xpose.msra.mxu0 0
      %453 = vmatprep.subr.bf16.mxu0 0
      %454 = vmatpush1.bf16.xpose.msra.mxu0 0
      %455 = vmatprep.subr.bf16.mxu0 0
      %456 = vmatpush1.bf16.xpose.msra.mxu0 0
      %457 = vmatprep.mubr.bf16.mxu0 0
      %458 = vmatmul.mubr.bf16.gmra.mrb[0].mxu0 %v420
      %v459 = vpop.f32.mrb[0].mxu0
      %v460 = vadd.f32 %v408, %v459
      %v461 = vpop.f32.mrb[0].mxu0
      %v462 = vpop.f32.mrb[0].mxu0
      %v463 = vadd.f32 %v409, %v462
      %v464 = vpop.f32.mrb[0].mxu0
      %465 = vdwg.mxu0
      %v466 = vadd.f32 %v460, %v326
      %v467 = vadd.f32 %v463, %v326
      %v468 = vsel %vm330, %v466, -inf
      %469 = vmax.xlane.f32.xlu0 %v468
      %v470 = vpop.xlane.xlu0 %469
      %v471 = vsel %vm330, %v467, -inf
      %472 = vmax.xlane.f32.xlu0 %v471
      %v473 = vpop.xlane.xlu0 %472
      %v474 = vsub.f32 %v466, %v470
      %v475 = vsub.f32 %v467, %v473
      %v476 = vmul.f32 %v474, 1.442695
      %v477 = vpow.pop %v476
      %v478 = vmul.f32 %v475, 1.442695
      %v479 = vpow.pop %v478
      %v480 = vsel %vm330, %v477, 0.0
      %481 = vadd.xlane.f32.xlu0 %v480
      %v482 = vpop.xlane.xlu0 %481
      %v483 = vsel %vm330, %v479, 0.0
      %484 = vadd.xlane.f32.xlu0 %v483
      %v485 = vpop.xlane.xlu0 %484
      %v486 = vrcp.pop %v482
      %v487 = vrcp.pop %v485
      %v488 = vmul.f32 %v477, %v486
      %v489 = vmul.f32 %v479, %v487
      %v490 = vpack.c.bf16 %v489, %v488
      %491 = vrot.lane.b32.xlu0 %v414, 56
      %v492 = vpop.permute.xlu0 %491
      %v495 = vsel %vm330, %v490, 0
      %497 = vmatprep.subr.bf16.mxu0 0
      %498 = vmatpush1.bf16.msra.mxu0 %v492
      %499 = vmatprep.subr.bf16.mxu0 0
      %500 = vmatpush1.bf16.msra.mxu0 0
      %501 = vmatprep.subr.bf16.mxu0 0
      %502 = vmatpush1.bf16.msra.mxu0 0
      %503 = vmatprep.subr.bf16.mxu0 0
      %504 = vmatpush1.bf16.msra.mxu0 0
      %505 = vmatprep.subr.bf16.mxu0 0
      %506 = vmatpush1.bf16.msra.mxu0 0
      %507 = vmatprep.subr.bf16.mxu0 0
      %508 = vmatpush1.bf16.msra.mxu0 0
      %509 = vmatprep.subr.bf16.mxu0 0
      %510 = vmatpush1.bf16.msra.mxu0 0
      %511 = vmatprep.subr.bf16.mxu0 0
      %512 = vmatpush1.bf16.msra.mxu0 0
      %513 = vmatprep.subr.bf16.mxu0 0
      %514 = vmatpush1.bf16.msra.mxu0 0
      %515 = vmatprep.subr.bf16.mxu0 0
      %516 = vmatpush1.bf16.msra.mxu0 0
      %517 = vmatprep.subr.bf16.mxu0 0
      %518 = vmatpush1.bf16.msra.mxu0 0
      %519 = vmatprep.subr.bf16.mxu0 0
      %520 = vmatpush1.bf16.msra.mxu0 0
      %521 = vmatprep.subr.bf16.mxu0 0
      %522 = vmatpush1.bf16.msra.mxu0 0
      %523 = vmatprep.subr.bf16.mxu0 0
      %524 = vmatpush1.bf16.msra.mxu0 0
      %525 = vmatprep.subr.bf16.mxu0 0
      %526 = vmatpush1.bf16.msra.mxu0 0
      %527 = vmatprep.subr.bf16.mxu0 0
      %528 = vmatpush1.bf16.msra.mxu0 0
      %529 = vmatprep.mubr.bf16.mxu0 0
      %530 = vmatmul.mubr.bf16.gmra.mrb[0].mxu0 %v495
      %v531 = vpop.f32.mrb[0].mxu0
      %v532 = vadd.f32 0.0, %v531
      %v533 = vpop.f32.mrb[0].mxu0
      %v534 = vpop.f32.mrb[0].mxu0
      %v535 = vadd.f32 0.0, %v534
      %v536 = vpop.f32.mrb[0].mxu0
      %537 = vdwg.mxu0
      %v538 = vpack.c.bf16 %v535, %v532
      %540 = vrot.lane.b32.xlu0 %v538, 8
      %v541 = vpop.permute.xlu0 %540
      %vm543 = vcmask 130112
      %544 = vst.msk [vmem:[#allocation2] sm:$0xff] %vm543, %v541
      %v545 = vld [vmem:[%s245] sm:$0xf]
      %v546 = vld [vmem:[%s245 + $0x4] sm:$0xf]
      %s547 = scalar_lea.vmem %s1, 16
      %v548 = vld [vmem:[%s547] sm:$0xf]
      %v549 = vld [vmem:[%s547 + $0x4] sm:$0xf]
      %v550 = vunpack.c.l.bf16 %v548
      %v551 = vunpack.c.l.bf16 %v549
      %v554 = vunpack.c.l.b16 %v545
      %v555 = vunpack.c.l.b16 %v546
      %v556 = vpack.c.b16 %v555, %v554
      %557 = vrot.lane.b32.xlu0 %v556, 112
      %v558 = vpop.permute.xlu0 %557
      %559 = vrot.lane.b32.xlu0 %v556, 80
      %v560 = vpop.permute.xlu0 %559
      %v562 = vsel %vm274, %v558, 0
      %v565 = vsel %vm274, %v560, 0
      %567 = vmatprep.subr.bf16.mxu0 0
      %568 = vmatpush1.bf16.xpose.msra.mxu0 %v565
      %569 = vmatprep.subr.bf16.mxu0 0
      %570 = vmatpush1.bf16.xpose.msra.mxu0 0
      %571 = vmatprep.subr.bf16.mxu0 0
      %572 = vmatpush1.bf16.xpose.msra.mxu0 0
      %573 = vmatprep.subr.bf16.mxu0 0
      %574 = vmatpush1.bf16.xpose.msra.mxu0 0
      %575 = vmatprep.subr.bf16.mxu0 0
      %576 = vmatpush1.bf16.xpose.msra.mxu0 0
      %577 = vmatprep.subr.bf16.mxu0 0
      %578 = vmatpush1.bf16.xpose.msra.mxu0 0
      %579 = vmatprep.subr.bf16.mxu0 0
      %580 = vmatpush1.bf16.xpose.msra.mxu0 0
      %581 = vmatprep.subr.bf16.mxu0 0
      %582 = vmatpush1.bf16.xpose.msra.mxu0 0
      %583 = vmatprep.subr.bf16.mxu0 0
      %584 = vmatpush1.bf16.xpose.msra.mxu0 0
      %585 = vmatprep.subr.bf16.mxu0 0
      %586 = vmatpush1.bf16.xpose.msra.mxu0 0
      %587 = vmatprep.subr.bf16.mxu0 0
      %588 = vmatpush1.bf16.xpose.msra.mxu0 0
      %589 = vmatprep.subr.bf16.mxu0 0
      %590 = vmatpush1.bf16.xpose.msra.mxu0 0
      %591 = vmatprep.subr.bf16.mxu0 0
      %592 = vmatpush1.bf16.xpose.msra.mxu0 0
      %593 = vmatprep.subr.bf16.mxu0 0
      %594 = vmatpush1.bf16.xpose.msra.mxu0 0
      %595 = vmatprep.subr.bf16.mxu0 0
      %596 = vmatpush1.bf16.xpose.msra.mxu0 0
      %597 = vmatprep.subr.bf16.mxu0 0
      %598 = vmatpush1.bf16.xpose.msra.mxu0 0
      %599 = vmatprep.mubr.bf16.mxu0 0
      %600 = vmatmul.mubr.bf16.gmra.mrb[0].mxu0 %v562
      %v601 = vpop.f32.mrb[0].mxu0
      %v602 = vadd.f32 %v550, %v601
      %v603 = vpop.f32.mrb[0].mxu0
      %v604 = vpop.f32.mrb[0].mxu0
      %v605 = vadd.f32 %v551, %v604
      %v606 = vpop.f32.mrb[0].mxu0
      %607 = vdwg.mxu0
      %v608 = vadd.f32 %v602, %v326
      %v609 = vadd.f32 %v605, %v326
      %v610 = vsel %vm330, %v608, -inf
      %611 = vmax.xlane.f32.xlu0 %v610
      %v612 = vpop.xlane.xlu0 %611
      %v613 = vsel %vm330, %v609, -inf
      %614 = vmax.xlane.f32.xlu0 %v613
      %v615 = vpop.xlane.xlu0 %614
      %v616 = vsub.f32 %v608, %v612
      %v617 = vsub.f32 %v609, %v615
      %v618 = vmul.f32 %v616, 1.442695
      %v619 = vpow.pop %v618
      %v620 = vmul.f32 %v617, 1.442695
      %v621 = vpow.pop %v620
      %v622 = vsel %vm330, %v619, 0.0
      %623 = vadd.xlane.f32.xlu0 %v622
      %v624 = vpop.xlane.xlu0 %623
      %v625 = vsel %vm330, %v621, 0.0
      %626 = vadd.xlane.f32.xlu0 %v625
      %v627 = vpop.xlane.xlu0 %626
      %v628 = vrcp.pop %v624
      %v629 = vrcp.pop %v627
      %v630 = vmul.f32 %v619, %v628
      %v631 = vmul.f32 %v621, %v629
      %v632 = vpack.c.bf16 %v631, %v630
      %633 = vrot.lane.b32.xlu0 %v556, 48
      %v634 = vpop.permute.xlu0 %633
      %v637 = vsel %vm330, %v632, 0
      %639 = vmatprep.subr.bf16.mxu0 0
      %640 = vmatpush1.bf16.msra.mxu0 %v634
      %641 = vmatprep.subr.bf16.mxu0 0
      %642 = vmatpush1.bf16.msra.mxu0 0
      %643 = vmatprep.subr.bf16.mxu0 0
      %644 = vmatpush1.bf16.msra.mxu0 0
      %645 = vmatprep.subr.bf16.mxu0 0
      %646 = vmatpush1.bf16.msra.mxu0 0
      %647 = vmatprep.subr.bf16.mxu0 0
      %648 = vmatpush1.bf16.msra.mxu0 0
      %649 = vmatprep.subr.bf16.mxu0 0
      %650 = vmatpush1.bf16.msra.mxu0 0
      %651 = vmatprep.subr.bf16.mxu0 0
      %652 = vmatpush1.bf16.msra.mxu0 0
      %653 = vmatprep.subr.bf16.mxu0 0
      %654 = vmatpush1.bf16.msra.mxu0 0
      %655 = vmatprep.subr.bf16.mxu0 0
      %656 = vmatpush1.bf16.msra.mxu0 0
      %657 = vmatprep.subr.bf16.mxu0 0
      %658 = vmatpush1.bf16.msra.mxu0 0
      %659 = vmatprep.subr.bf16.mxu0 0
      %660 = vmatpush1.bf16.msra.mxu0 0
      %661 = vmatprep.subr.bf16.mxu0 0
      %662 = vmatpush1.bf16.msra.mxu0 0
      %663 = vmatprep.subr.bf16.mxu0 0
      %664 = vmatpush1.bf16.msra.mxu0 0
      %665 = vmatprep.subr.bf16.mxu0 0
      %666 = vmatpush1.bf16.msra.mxu0 0
      %667 = vmatprep.subr.bf16.mxu0 0
      %668 = vmatpush1.bf16.msra.mxu0 0
      %669 = vmatprep.subr.bf16.mxu0 0
      %670 = vmatpush1.bf16.msra.mxu0 0
      %671 = vmatprep.mubr.bf16.mxu0 0
      %672 = vmatmul.mubr.bf16.gmra.mrb[0].mxu0 %v637
      %v673 = vpop.f32.mrb[0].mxu0
      %v674 = vadd.f32 0.0, %v673
      %v675 = vpop.f32.mrb[0].mxu0
      %v676 = vpop.f32.mrb[0].mxu0
      %v677 = vadd.f32 0.0, %v676
      %v678 = vpop.f32.mrb[0].mxu0
      %679 = vdwg.mxu0
      %v680 = vpack.c.bf16 %v677, %v674
      %682 = vrot.lane.b32.xlu0 %v680, 16
      %v683 = vpop.permute.xlu0 %682
      %vm685 = vcmask 195712
      %686 = vst.msk [vmem:[#allocation2] sm:$0xff] %vm685, %v683
      %v687 = vld [vmem:[%s245] sm:$0xf]
      %v688 = vld [vmem:[%s245 + $0x4] sm:$0xf]
      %s689 = scalar_lea.vmem %s1, 24
      %v690 = vld [vmem:[%s689] sm:$0xf]
      %v691 = vld [vmem:[%s689 + $0x4] sm:$0xf]
      %v692 = vunpack.c.l.bf16 %v690
      %v693 = vunpack.c.l.bf16 %v691
      %v696 = vunpack.c.l.b16 %v687
      %v697 = vunpack.c.l.b16 %v688
      %v698 = vpack.c.b16 %v697, %v696
      %699 = vrot.lane.b32.xlu0 %v698, 104
      %v700 = vpop.permute.xlu0 %699
      %701 = vrot.lane.b32.xlu0 %v698, 72
      %v702 = vpop.permute.xlu0 %701
      %v704 = vsel %vm274, %v700, 0
      %v707 = vsel %vm274, %v702, 0
      %709 = vmatprep.subr.bf16.mxu0 0
      %710 = vmatpush1.bf16.xpose.msra.mxu0 %v707
      %711 = vmatprep.subr.bf16.mxu0 0
      %712 = vmatpush1.bf16.xpose.msra.mxu0 0
      %713 = vmatprep.subr.bf16.mxu0 0
      %714 = vmatpush1.bf16.xpose.msra.mxu0 0
      %715 = vmatprep.subr.bf16.mxu0 0
      %716 = vmatpush1.bf16.xpose.msra.mxu0 0
      %717 = vmatprep.subr.bf16.mxu0 0
      %718 = vmatpush1.bf16.xpose.msra.mxu0 0
      %719 = vmatprep.subr.bf16.mxu0 0
      %720 = vmatpush1.bf16.xpose.msra.mxu0 0
      %721 = vmatprep.subr.bf16.mxu0 0
      %722 = vmatpush1.bf16.xpose.msra.mxu0 0
      %723 = vmatprep.subr.bf16.mxu0 0
      %724 = vmatpush1.bf16.xpose.msra.mxu0 0
      %725 = vmatprep.subr.bf16.mxu0 0
      %726 = vmatpush1.bf16.xpose.msra.mxu0 0
      %727 = vmatprep.subr.bf16.mxu0 0
      %728 = vmatpush1.bf16.xpose.msra.mxu0 0
      %729 = vmatprep.subr.bf16.mxu0 0
      %730 = vmatpush1.bf16.xpose.msra.mxu0 0
      %731 = vmatprep.subr.bf16.mxu0 0
      %732 = vmatpush1.bf16.xpose.msra.mxu0 0
      %733 = vmatprep.subr.bf16.mxu0 0
      %734 = vmatpush1.bf16.xpose.msra.mxu0 0
      %735 = vmatprep.subr.bf16.mxu0 0
      %736 = vmatpush1.bf16.xpose.msra.mxu0 0
      %737 = vmatprep.subr.bf16.mxu0 0
      %738 = vmatpush1.bf16.xpose.msra.mxu0 0
      %739 = vmatprep.subr.bf16.mxu0 0
      %740 = vmatpush1.bf16.xpose.msra.mxu0 0
      %741 = vmatprep.mubr.bf16.mxu0 0
      %742 = vmatmul.mubr.bf16.gmra.mrb[0].mxu0 %v704
      %v743 = vpop.f32.mrb[0].mxu0
      %v744 = vadd.f32 %v692, %v743
      %v745 = vpop.f32.mrb[0].mxu0
      %v746 = vpop.f32.mrb[0].mxu0
      %v747 = vadd.f32 %v693, %v746
      %v748 = vpop.f32.mrb[0].mxu0
      %749 = vdwg.mxu0
      %v750 = vadd.f32 %v744, %v326
      %v751 = vadd.f32 %v747, %v326
      %v752 = vsel %vm330, %v750, -inf
      %753 = vmax.xlane.f32.xlu0 %v752
      %v754 = vpop.xlane.xlu0 %753
      %v755 = vsel %vm330, %v751, -inf
      %756 = vmax.xlane.f32.xlu0 %v755
      %v757 = vpop.xlane.xlu0 %756
      %v758 = vsub.f32 %v750, %v754
      %v759 = vsub.f32 %v751, %v757
      %v760 = vmul.f32 %v758, 1.442695
      %v761 = vpow.pop %v760
      %v762 = vmul.f32 %v759, 1.442695
      %v763 = vpow.pop %v762
      %v764 = vsel %vm330, %v761, 0.0
      %765 = vadd.xlane.f32.xlu0 %v764
      %v766 = vpop.xlane.xlu0 %765
      %v767 = vsel %vm330, %v763, 0.0
      %768 = vadd.xlane.f32.xlu0 %v767
      %v769 = vpop.xlane.xlu0 %768
      %v770 = vrcp.pop %v766
      %v771 = vrcp.pop %v769
      %v772 = vmul.f32 %v761, %v770
      %v773 = vmul.f32 %v763, %v771
      %v774 = vpack.c.bf16 %v773, %v772
      %775 = vrot.lane.b32.xlu0 %v698, 40
      %v776 = vpop.permute.xlu0 %775
      %v779 = vsel %vm330, %v774, 0
      %781 = vmatprep.subr.bf16.mxu0 0
      %782 = vmatpush1.bf16.msra.mxu0 %v776
      %783 = vmatprep.subr.bf16.mxu0 0
      %784 = vmatpush1.bf16.msra.mxu0 0
      %785 = vmatprep.subr.bf16.mxu0 0
      %786 = vmatpush1.bf16.msra.mxu0 0
      %787 = vmatprep.subr.bf16.mxu0 0
      %788 = vmatpush1.bf16.msra.mxu0 0
      %789 = vmatprep.subr.bf16.mxu0 0
      %790 = vmatpush1.bf16.msra.mxu0 0
      %791 = vmatprep.subr.bf16.mxu0 0
      %792 = vmatpush1.bf16.msra.mxu0 0
      %793 = vmatprep.subr.bf16.mxu0 0
      %794 = vmatpush1.bf16.msra.mxu0 0
      %795 = vmatprep.subr.bf16.mxu0 0
      %796 = vmatpush1.bf16.msra.mxu0 0
      %797 = vmatprep.subr.bf16.mxu0 0
      %798 = vmatpush1.bf16.msra.mxu0 0
      %799 = vmatprep.subr.bf16.mxu0 0
      %800 = vmatpush1.bf16.msra.mxu0 0
      %801 = vmatprep.subr.bf16.mxu0 0
      %802 = vmatpush1.bf16.msra.mxu0 0
      %803 = vmatprep.subr.bf16.mxu0 0
      %804 = vmatpush1.bf16.msra.mxu0 0
      %805 = vmatprep.subr.bf16.mxu0 0
      %806 = vmatpush1.bf16.msra.mxu0 0
      %807 = vmatprep.subr.bf16.mxu0 0
      %808 = vmatpush1.bf16.msra.mxu0 0
      %809 = vmatprep.subr.bf16.mxu0 0
      %810 = vmatpush1.bf16.msra.mxu0 0
      %811 = vmatprep.subr.bf16.mxu0 0
      %812 = vmatpush1.bf16.msra.mxu0 0
      %813 = vmatprep.mubr.bf16.mxu0 0
      %814 = vmatmul.mubr.bf16.gmra.mrb[0].mxu0 %v779
      %v815 = vpop.f32.mrb[0].mxu0
      %v816 = vadd.f32 0.0, %v815
      %v817 = vpop.f32.mrb[0].mxu0
      %v818 = vpop.f32.mrb[0].mxu0
      %v819 = vadd.f32 0.0, %v818
      %v820 = vpop.f32.mrb[0].mxu0
      %821 = vdwg.mxu0
      %v822 = vpack.c.bf16 %v819, %v816
      %824 = vrot.lane.b32.xlu0 %v822, 24
      %v825 = vpop.permute.xlu0 %824
      %vm827 = vcmask 261312
      %828 = vst.msk [vmem:[#allocation2] sm:$0xff] %vm827, %v825
      %v829 = vld [vmem:[#allocation2] sm:$0xff]
      %v830 = vld [vmem:[%s3] sm:$0xf]
      %v831 = vld [vmem:[%s3 + $0x4] sm:$0xf]
      %v832 = vld [vmem:[%s3 + $0x8] sm:$0xf]
      %v833 = vld [vmem:[%s3 + $0xc] sm:$0xf]
      %v838 = vunpack.c.l.b16 %v830
      %v839 = vunpack.c.l.b16 %v831
      %v840 = vunpack.c.l.b16 %v832
      %v841 = vunpack.c.l.b16 %v833
      %v842 = vpack.c.b16 %v839, %v838
      %v843 = vpack.c.b16 %v841, %v840
      %vm846 = vcmask 261120
      %v848 = vsel %vm846, %v829, 0
      %850 = vmatprep.subr.bf16.mxu0 0
      %851 = vmatpush1.bf16.msra.mxu0 %v842
      %852 = vmatprep.subr.bf16.mxu0 0
      %853 = vmatpush1.bf16.msra.mxu0 %v843
      %854 = vmatprep.subr.bf16.mxu0 0
      %855 = vmatpush1.bf16.msra.mxu0 0
      %856 = vmatprep.subr.bf16.mxu0 0
      %857 = vmatpush1.bf16.msra.mxu0 0
      %858 = vmatprep.subr.bf16.mxu0 0
      %859 = vmatpush1.bf16.msra.mxu0 0
      %860 = vmatprep.subr.bf16.mxu0 0
      %861 = vmatpush1.bf16.msra.mxu0 0
      %862 = vmatprep.subr.bf16.mxu0 0
      %863 = vmatpush1.bf16.msra.mxu0 0
      %864 = vmatprep.subr.bf16.mxu0 0
      %865 = vmatpush1.bf16.msra.mxu0 0
      %866 = vmatprep.subr.bf16.mxu0 0
      %867 = vmatpush1.bf16.msra.mxu0 0
      %868 = vmatprep.subr.bf16.mxu0 0
      %869 = vmatpush1.bf16.msra.mxu0 0
      %870 = vmatprep.subr.bf16.mxu0 0
      %871 = vmatpush1.bf16.msra.mxu0 0
      %872 = vmatprep.subr.bf16.mxu0 0
      %873 = vmatpush1.bf16.msra.mxu0 0
      %874 = vmatprep.subr.bf16.mxu0 0
      %875 = vmatpush1.bf16.msra.mxu0 0
      %876 = vmatprep.subr.bf16.mxu0 0
      %877 = vmatpush1.bf16.msra.mxu0 0
      %878 = vmatprep.subr.bf16.mxu0 0
      %879 = vmatpush1.bf16.msra.mxu0 0
      %880 = vmatprep.subr.bf16.mxu0 0
      %881 = vmatpush1.bf16.msra.mxu0 0
      %882 = vmatprep.mubr.bf16.mxu0 0
      %883 = vmatmul.mubr.bf16.gmra.mrb[0].mxu0 %v848
      %v884 = vpop.f32.mrb[0].mxu0
      %v885 = vadd.f32 0.0, %v884
      %v886 = vpop.f32.mrb[0].mxu0
      %v887 = vpop.f32.mrb[0].mxu0
      %v888 = vadd.f32 0.0, %v887
      %v889 = vpop.f32.mrb[0].mxu0
      %890 = vdwg.mxu0
      %v891 = vld [vmem:[%s253] sm:$0xf]
      %v892 = vld [vmem:[%s253 + $0x4] sm:$0xf]
      %v893 = vunpack.c.l.bf16 %v891
      %v894 = vunpack.c.l.bf16 %v892
      %v895 = vadd.f32 %v893, %v885
      %v896 = vadd.f32 %v894, %v888
      %v897 = vpack.c.bf16 %v896, %v895
      %v899 = vunpack.c.l.b16 %v897
      %v900 = vunpack.c.h.b16 %v897
      %v901 = vpack.c.b16 %v899, %v899
      %v902 = vpack.c.b16 %v900, %v900
      %vm905 = vcmask 257024
      %906 = vst.msk [vmem:[%s258] sm:$0xf] %vm905, %v901
      %907 = vst.msk [vmem:[%s258 + $0x4] sm:$0xf] %vm905, %v902
      %p908 = scmp.lt.s32.totalorder %s16, 1
      %s909 = scalar_select %p908, %s16, 1
      %s910 = smul.addr %s909, 2
      %s911 = smul.addr %s910, 4
      %s912 = scalar_lea.vmem %s5, %s911
      // Predicated region
      $region41: #{_lambda_.8} parent=39 // pred_check
        %p913 = pneg %p154
      $region42: #{_lambda_.8} parent=39 // pred_check_branch
        %915 = sbr.rel (%p913) target = $region44
      $region43: #{_lambda_.8} parent=39 // pred_region
        _
      $region44: #{_lambda_.8} parent=39 // pred_fallthru
        _
    $region40: #{_lambda_.8} parent=5 // pred_fallthru
      _
    %p916 = scmp.le.s32.totalorder 2, %s11
    // Predicated region
    $region45: #{_lambda_.8} parent=5 // pred_check
      %p917 = pneg %p916
    $region46: #{_lambda_.8} parent=5 // pred_check_branch
      %919 = sbr.rel (%p917) target = $region48
    $region47: #{_lambda_.8} parent=5 // pred_region
      %s920 = ssub.s32 %s11, 2
      // Predicated region
      $region49: #{_lambda_.8} parent=47 // pred_check
        %p921 = pneg %p160
      $region50: #{_lambda_.8} parent=47 // pred_check_branch
        %923 = sbr.rel (%p921) target = $region52
      $region51: #{_lambda_.8} parent=47 // pred_region
        %p924 = scmp.lt.s32.totalorder %s17, 1
        %s925 = scalar_select %p924, %s17, 1
        %s926 = smul.addr %s925, 2
        %s927 = smul.addr %s926, 4
        %s928 = scalar_lea.vmem %s5, %s927
      $region52: #{_lambda_.8} parent=47 // pred_fallthru
        _
    $region48: #{_lambda_.8} parent=5 // pred_fallthru
      _
  $region6: #{_lambda_.8} parent=0 // loop_footer
    %s15 = sadd.s32 1, %s11
  $region7: #{_lambda_.8} parent=0 // loop_footer_branch
    %10 = sbr.rel target = $region3
  $region8: #{_lambda_.8} parent=0 // loop_exit
    _

// kernel: _lambda_.13
$region0: #{_lambda_.13}
  #allocation0 [shape = 'u32[]', space=smem, size = 0x4, offset = 0x4, fixed_abs, tag = 'smem constant byte address 0x4 - core index']
  #allocation1 [shape = 'u32[144,128]{1,0:T(1,128)}', space=vmem, size = 0x12000, scoped, tag = 'internal scratch']
  %s0 = inlined_call_operand.vmem [shape: bf16[2,16,32], index: 0, kind: input, shape index: {}]
  %s1 = inlined_call_operand.vmem [shape: f32[1,32], index: 1, kind: input, shape index: {}]
  %s2 = inlined_call_operand.vmem [shape: bf16[32,64], index: 2, kind: input, shape index: {}]
  %s3 = inlined_call_operand.vmem [shape: f32[1,64], index: 3, kind: input, shape index: {}]
  %s4 = inlined_call_operand.hbm [shape: f32[2,64], index: 4, kind: output, shape index: {}]
  %s5 = sld [smem:[#allocation0]]
  $region26: #{_lambda_.13} parent=0
    _
  %s7 = ssub.s32 1, %s5
  %s8 = scalar_select 0, %s7, %s5
  $region1: #{_lambda_.13} parent=0
    #allocation2 [shape = 'u8[1024]{0}', space=vmem, size = 0x400, scoped, tag = 'output window, operand 0, single buffered']
    #allocation3 [shape = 's32[1]{0}', space=sflag, size = 0x4, scoped, tag = 'scoped memory for _lambda_.13']
    %9 = vsyncpa [#allocation3], 0
    // Predicated region
    $region2: #{_lambda_.13} parent=1 // pred_check
      _
    $region3: #{_lambda_.13} parent=1 // pred_check_branch
      %11 = sbr.rel (0) target = $region5
    $region4: #{_lambda_.13} parent=1 // pred_region
      _
    $region5: #{_lambda_.13} parent=1 // pred_fallthru
      _
    // Predicated region
    $region6: #{_lambda_.13} parent=1 // pred_check
      _
    $region7: #{_lambda_.13} parent=1 // pred_check_branch
      %13 = sbr.rel (0) target = $region9
    $region8: #{_lambda_.13} parent=1 // pred_region
      _
    $region9: #{_lambda_.13} parent=1 // pred_fallthru
      _
    // Predicated region
    $region10: #{_lambda_.13} parent=1 // pred_check
      _
    $region11: #{_lambda_.13} parent=1 // pred_check_branch
      %15 = sbr.rel (0) target = $region13
    $region12: #{_lambda_.13} parent=1 // pred_region
      _
    $region13: #{_lambda_.13} parent=1 // pred_fallthru
      _
    // Predicated region
    $region14: #{_lambda_.13} parent=1 // pred_check
      _
    $region15: #{_lambda_.13} parent=1 // pred_check_branch
      %17 = sbr.rel (0) target = $region17
    $region16: #{_lambda_.13} parent=1 // pred_region
      _
    $region17: #{_lambda_.13} parent=1 // pred_fallthru
      _
    %v19 = vld [vmem:[%s0] sm:$0xf]
    %v20 = vld [vmem:[%s0 + $0x4] sm:$0xf]
    %v21 = vld [vmem:[%s0 + $0x8] sm:$0xf]
    %v22 = vld [vmem:[%s0 + $0xc] sm:$0xf]
    %v23 = vunpack.c.l.bf16 %v19
    %v24 = vunpack.c.l.bf16 %v20
    %v25 = vunpack.c.l.bf16 %v21
    %v26 = vunpack.c.l.bf16 %v22
    %v27 = vld [vmem:[%s1] sm:$0x1]
    %v28 = vmul.f32 %v23, %v23
    %v29 = vmul.f32 %v24, %v24
    %v30 = vmul.f32 %v25, %v25
    %v31 = vmul.f32 %v26, %v26
    %vm32 = vcmask 261120
    %v33 = vsel %vm32, %v28, 0.0
    %34 = vadd.xlane.f32.xlu0 %v33
    %v35 = vpop.xlane.xlu0 %34
    %v36 = vsel %vm32, %v29, 0.0
    %37 = vadd.xlane.f32.xlu0 %v36
    %v38 = vpop.xlane.xlu0 %37
    %v39 = vsel %vm32, %v30, 0.0
    %40 = vadd.xlane.f32.xlu0 %v39
    %v41 = vpop.xlane.xlu0 %40
    %v42 = vsel %vm32, %v31, 0.0
    %43 = vadd.xlane.f32.xlu0 %v42
    %v44 = vpop.xlane.xlu0 %43
    %v45 = vrcp.pop 32.0
    %v46 = vmul.f32 %v35, %v45
    %v47 = vmul.f32 %v38, %v45
    %v48 = vmul.f32 %v41, %v45
    %v49 = vmul.f32 %v44, %v45
    %v50 = vadd.f32 %v46, 1e-06
    %v51 = vadd.f32 %v47, 1e-06
    %v52 = vadd.f32 %v48, 1e-06
    %v53 = vadd.f32 %v49, 1e-06
    %v54 = vrsqrt.pop %v50
    %v55 = vrsqrt.pop %v51
    %v56 = vrsqrt.pop %v52
    %v57 = vrsqrt.pop %v53
    %v58 = vmul.f32 %v23, %v54
    %v59 = vmul.f32 %v24, %v55
    %v60 = vmul.f32 %v25, %v56
    %v61 = vmul.f32 %v26, %v57
    %v63 = vlaneseq
    %v64 = vshrl.u32 %v63, 7
    %v65 = vsub.s32 0, %v64
    %v66 = vrot.slane %v27, %v65
    %v68 = vmul.f32 %v58, %v66
    %v69 = vmul.f32 %v59, %v66
    %v70 = vmul.f32 %v60, %v66
    %v71 = vmul.f32 %v61, %v66
    %v72 = vsel %vm32, %v68, 0.0
    %v73 = vsel %vm32, %v69, 0.0
    %v74 = vadd.f32 %v72, %v73
    %v75 = vrot.slane %v74, 4
    %v76 = vadd.f32 %v74, %v75
    %v77 = vrot.slane %v76, 2
    %v78 = vadd.f32 %v76, %v77
    %v79 = vrot.slane %v78, 1
    %v80 = vadd.f32 %v78, %v79
    %v81 = vsel %vm32, %v70, 0.0
    %v82 = vsel %vm32, %v71, 0.0
    %v83 = vadd.f32 %v81, %v82
    %v84 = vrot.slane %v83, 4
    %v85 = vadd.f32 %v83, %v84
    %v86 = vrot.slane %v85, 2
    %v87 = vadd.f32 %v85, %v86
    %v88 = vrot.slane %v87, 1
    %v89 = vadd.f32 %v87, %v88
    %v90 = vrcp.pop 16.0
    %v91 = vmul.f32 %v80, %v90
    %v92 = vmul.f32 %v89, %v90
    %v93 = vpack.c.bf16 %v91, %v91
    %v94 = vpack.c.bf16 %v92, %v92
    %v95 = vld [vmem:[%s2] sm:$0xf]
    %v96 = vld [vmem:[%s2 + $0x4] sm:$0xf]
    %v97 = vld [vmem:[%s2 + $0x8] sm:$0xf]
    %v98 = vld [vmem:[%s2 + $0xc] sm:$0xf]
    %v99 = vld [vmem:[%s3] sm:$0x1]
    %v101 = vlaneseq
    %v102 = vshrl.u32 %v101, 7
    %v103 = vsub.s32 0, %v102
    %v104 = vrot.slane %v99, %v103
    %v108 = vunpack.c.l.b16 %v93
    %v109 = vunpack.c.l.b16 %v94
    %vm110 = vcmask 1041409
    %v111 = vsel %vm110, %v109, %v108
    %v112 = vpack.c.b16 %v111, %v111
    %v117 = vunpack.c.l.b16 %v95
    %v118 = vunpack.c.l.b16 %v96
    %v119 = vunpack.c.l.b16 %v97
    %v120 = vunpack.c.l.b16 %v98
    %v121 = vpack.c.b16 %v118, %v117
    %v122 = vpack.c.b16 %v120, %v119
    %v126 = vsel %vm32, %v112, 0
    %128 = vmatprep.subr.bf16.mxu0 0
    %129 = vmatpush1.bf16.msra.mxu0 %v121
    %130 = vmatprep.subr.bf16.mxu0 0
    %131 = vmatpush1.bf16.msra.mxu0 %v122
    %132 = vmatprep.subr.bf16.mxu0 0
    %133 = vmatpush1.bf16.msra.mxu0 0
    %134 = vmatprep.subr.bf16.mxu0 0
    %135 = vmatpush1.bf16.msra.mxu0 0
    %136 = vmatprep.subr.bf16.mxu0 0
    %137 = vmatpush1.bf16.msra.mxu0 0
    %138 = vmatprep.subr.bf16.mxu0 0
    %139 = vmatpush1.bf16.msra.mxu0 0
    %140 = vmatprep.subr.bf16.mxu0 0
    %141 = vmatpush1.bf16.msra.mxu0 0
    %142 = vmatprep.subr.bf16.mxu0 0
    %143 = vmatpush1.bf16.msra.mxu0 0
    %144 = vmatprep.subr.bf16.mxu0 0
    %145 = vmatpush1.bf16.msra.mxu0 0
    %146 = vmatprep.subr.bf16.mxu0 0
    %147 = vmatpush1.bf16.msra.mxu0 0
    %148 = vmatprep.subr.bf16.mxu0 0
    %149 = vmatpush1.bf16.msra.mxu0 0
    %150 = vmatprep.subr.bf16.mxu0 0
    %151 = vmatpush1.bf16.msra.mxu0 0
    %152 = vmatprep.subr.bf16.mxu0 0
    %153 = vmatpush1.bf16.msra.mxu0 0
    %154 = vmatprep.subr.bf16.mxu0 0
    %155 = vmatpush1.bf16.msra.mxu0 0
    %156 = vmatprep.subr.bf16.mxu0 0
    %157 = vmatpush1.bf16.msra.mxu0 0
    %158 = vmatprep.subr.bf16.mxu0 0
    %159 = vmatpush1.bf16.msra.mxu0 0
    %160 = vmatprep.mubr.bf16.mxu0 0
    %161 = vmatmul.mubr.bf16.gmra.mrb[0].mxu0 %v126
    %v162 = vpop.f32.mrb[0].mxu0
    %v163 = vadd.f32 %v104, %v162
    %v164 = vpop.f32.mrb[0].mxu0
    %v165 = vpop.f32.mrb[0].mxu0
    %v166 = vpop.f32.mrb[0].mxu0
    %167 = vdwg.mxu0
    %vm168 = vcmask 517120
    %169 = vst.msk [vmem:[#allocation2] sm:$0x3] %vm168, %v163
    // Predicated region
    $region18: #{_lambda_.13} parent=1 // pred_check
      _
    $region19: #{_lambda_.13} parent=1 // pred_check_branch
      %171 = sbr.rel (0) target = $region21
    $region20: #{_lambda_.13} parent=1 // pred_region
      %s173 = ssub.s32 32, 32
      %174 = vsyncadd [#allocation3], %s173
      %s176 = sshll.u32 [#allocation2], 4
      %s177 = int_to_ptr.vmem [resolvable:$true] %s176
      %179 = dma.vmem_to_hbm [thread:$0]  %s177, 32, %s4, [#allocation3]
    $region21: #{_lambda_.13} parent=1 // pred_fallthru
      _
    // Predicated region
    $region22: #{_lambda_.13} parent=1 // pred_check
      _
    $region23: #{_lambda_.13} parent=1 // pred_check_branch
      %181 = sbr.rel (0) target = $region25
    $region24: #{_lambda_.13} parent=1 // pred_region
      %182 = dma.done [#allocation3], 32
    $region25: #{_lambda_.13} parent=1 // pred_fallthru
      _
    %183 = vsyncpa [#allocation3], 1

</llo_original>
